<compile_context>
chip_gen: v5e
topology: v5e:2x2
jax: 0.10.0
libtpu: 0.0.40
codegen_flags: <defaults>
</compile_context>

<pallas_src>
import jax
import jax.numpy as jnp
from jax.experimental import pallas as pl
from jax.experimental.pallas import tpu as pltpu

LANES = 128            # lane width of a vreg; batch is laid out (rows, LANES)
MAX_BLOCK_ROWS = 1024  # 1024*128*4B = 512 KiB per tile per stream; VALU-bound kernel,
                       # so bigger tiles just amortize per-step overhead.


def _round_up(n, m):
    return ((n + m - 1) // m) * m


def _quantile_regressor_kernel(w1_ref, b1_ref, w2_ref, b2_ref, mass_ref, x_ref, out_ref):
    """Fused MLP(mass) -> compare with x -> count, all on the VPU, lane-dense.

    Weight refs are flat 1-D SMEM arrays:
      w1_ref: (H,)   layer-1 weight   (Linear(1, H))
      b1_ref: (H,)   layer-1 bias
      w2_ref: (H*Q,) layer-2 weight, row-major [h, q]
      b2_ref: (Q,)   layer-2 bias (folded into the compare threshold)
    """
    m = mass_ref[...]                              # (block_rows, 128) f32, batch-in-lanes
    xv = x_ref[...]                                # (block_rows, 128) f32

    hdim = w1_ref.shape[0]                         # hidden units (32)
    qdim = b2_ref.shape[0]                         # quantiles (3)

    # (preds < x)  <=>  (raw_q < x - b2[q]); hoist the per-quantile threshold.
    thr = [xv - b2_ref[q] for q in range(qdim)]

    # raw_q = sum_h w2[h, q] * relu(w1[h] * mass + b1[h])
    # (layer 1 + layer 2 fused; weights are scalar broadcasts from SMEM, no MXU)
    hid0 = jnp.maximum(w1_ref[0] * m + b1_ref[0], 0.0)
    raws = [w2_ref[q] * hid0 for q in range(qdim)]
    for hh in range(1, hdim):
        hid = jnp.maximum(w1_ref[hh] * m + b1_ref[hh], 0.0)
        for q in range(qdim):
            raws[q] = raws[q] + w2_ref[hh * qdim + q] * hid

    # Count with Q int adds (no axis reduction, no XLU).
    count = (raws[0] < thr[0]).astype(jnp.int32)
    for q in range(1, qdim):
        count = count + (raws[q] < thr[q]).astype(jnp.int32)

    out_ref[...] = count                           # full, unmasked (block_rows, 128) store


def quantile_regressor_forward(x, mass, w1, b1, w2, b2, max_block_rows=MAX_BLOCK_ROWS):
    """x: (B,1) f32, mass: (B,1) f32 -> (B,1) int32 discriminant."""
    B = x.shape[0]
    qdim = w2.shape[1]

    # Lay the batch out lane-dense: pad B up to a whole number of (block_rows, 128) tiles.
    rows = -(-B // LANES)                          # ceil(B / 128)
    block_rows = min(max_block_rows, _round_up(rows, 8))
    rows_pad = _round_up(rows, block_rows)
    n_pad = rows_pad * LANES

    mass2 = jnp.zeros((n_pad,), jnp.float32).at[:B].set(mass[:, 0]).reshape(rows_pad, LANES)
    x2 = jnp.zeros((n_pad,), jnp.float32).at[:B].set(x[:, 0]).reshape(rows_pad, LANES)

    # Flatten tiny weights to 1-D so SMEM padding stays a few hundred bytes
    # (2-D SMEM pads each array to multiples of [8, 128] words).
    w1f = w1.reshape(-1).astype(jnp.float32)       # (H,)
    b1f = b1.reshape(-1).astype(jnp.float32)       # (H,)
    w2f = w2.reshape(-1).astype(jnp.float32)       # (H*Q,), row-major [h, q]
    b2f = b2.reshape(-1).astype(jnp.float32)       # (Q,)
    assert w2f.shape[0] == w1f.shape[0] * qdim

    smem = pl.BlockSpec(memory_space=pltpu.MemorySpace.SMEM)   # tiny weights, scalar-read
    tile = lambda: pl.BlockSpec((block_rows, LANES), lambda i: (i, 0))

    out = pl.pallas_call(
        _quantile_regressor_kernel,
        out_shape=jax.ShapeDtypeStruct((rows_pad, LANES), jnp.int32),
        grid=(rows_pad // block_rows,),
        in_specs=[smem, smem, smem, smem, tile(), tile()],
        out_specs=tile(),
        compiler_params=pltpu.CompilerParams(
            dimension_semantics=("parallel",),
            vmem_limit_bytes=32 * 1024 * 1024,
        ),
    )(w1f, b1f, w2f, b2f, mass2, x2)

    # Drop padding, restore the module's (B, 1) column-vector output.
    return out.reshape(-1)[:B].reshape(B, 1)


def reference_forward(x, mass, w1, b1, w2, b2):
    h = jnp.maximum(mass @ w1 + b1, 0.0)
    preds = jnp.dot(h, w2, precision=jax.lax.Precision.HIGHEST) + b2
    return jnp.sum((preds < x).astype(jnp.int32), axis=-1, keepdims=True)


if __name__ == "__main__":
    # Small shapes consistent with the module: mass is a (B,1) scalar feature,
    # the network emits one prediction per quantile (quantiles = [0.1, 0.5, 0.9]).
    H = 32
    quantiles = [0.1, 0.5, 0.9]
    Q = len(quantiles)

    key = jax.random.PRNGKey(0)
    k_mass, k_x, k_w1, k_b1, k_w2, k_b2 = jax.random.split(key, 6)

    # Deterministic synthetic parameters for `network` (Linear(1,H) + ReLU + Linear(H,Q)),
    # stored (in_features, out_features).
    w1 = jax.random.normal(k_w1, (1, H), dtype=jnp.float32) * 0.5
    b1 = jax.random.normal(k_b1, (1, H), dtype=jnp.float32) * 0.1
    w2 = jax.random.normal(k_w2, (H, Q), dtype=jnp.float32) * 0.2
    b2 = jax.random.normal(k_b2, (1, Q), dtype=jnp.float32) * 0.1

    # Check 1: tiny batch (single grid step, padded up to one (8,128) tile).
    B = 8
    mass = jax.random.normal(k_mass, (B, 1), dtype=jnp.float32)
    x = jax.random.normal(k_x, (B, 1), dtype=jnp.float32)
    out = jax.block_until_ready(quantile_regressor_forward(x, mass, w1, b1, w2, b2))
    ref = reference_forward(x, mass, w1, b1, w2, b2)
    assert out.shape == (B, 1) and out.dtype == jnp.int32, (out.shape, out.dtype)
    assert jnp.array_equal(out, ref), (out, ref)

    # Check 2: non-multiple-of-128 batch with a multi-step grid (forces small tiles so
    # the padded remainder + parallel grid path is exercised).
    B2 = 2000
    mass2 = jax.random.normal(jax.random.fold_in(k_mass, 1), (B2, 1), dtype=jnp.float32)
    x2 = jax.random.normal(jax.random.fold_in(k_x, 1), (B2, 1), dtype=jnp.float32)
    out2 = jax.block_until_ready(
        quantile_regressor_forward(x2, mass2, w1, b1, w2, b2, max_block_rows=8))
    ref2 = reference_forward(x2, mass2, w1, b1, w2, b2)
    assert out2.shape == (B2, 1) and jnp.array_equal(out2, ref2)

    # Check 3: default (large) tile path — single step, big block, same results.
    out3 = jax.block_until_ready(quantile_regressor_forward(x2, mass2, w1, b1, w2, b2))
    assert jnp.array_equal(out3, ref2)

    # TODO(synk): PyTorch's bool.sum() yields int64; TPU kernel emits int32 counts
    # (values identical, max count == number of quantiles).
    print("KERNEL_OK")
</pallas_src>

<mosaic_0001>
module attributes {stable_mosaic.version = 11 : i64} {
  func.func @_quantile_regressor_kernel(%arg0: i32, %arg1: memref<32xf32, #tpu.memory_space<smem>>, %arg2: memref<32xf32, #tpu.memory_space<smem>>, %arg3: memref<96xf32, #tpu.memory_space<smem>>, %arg4: memref<3xf32, #tpu.memory_space<smem>>, %arg5: memref<8x128xf32, #tpu.memory_space<vmem>>, %arg6: memref<8x128xf32, #tpu.memory_space<vmem>>, %arg7: memref<8x128xi32, #tpu.memory_space<vmem>>) attributes {dimension_semantics = [#tpu.dimension_semantics<parallel>], iteration_bounds = array<i64: 1>, scalar_prefetch = 0 : i64, scratch_operands = 0 : i64, tpu.core_type = #tpu.core_type<tc>, window_params = [{transform_indices = @transform_0, window_bounds = array<i64: 32>}, {transform_indices = @transform_1, window_bounds = array<i64: 32>}, {transform_indices = @transform_2, window_bounds = array<i64: 96>}, {transform_indices = @transform_3, window_bounds = array<i64: 3>}, {transform_indices = @transform_4, window_bounds = array<i64: 8, 128>}, {transform_indices = @transform_5, window_bounds = array<i64: 8, 128>}, {transform_indices = @transform_6, window_bounds = array<i64: 8, 128>}]} {
    %c0 = arith.constant 0 : index
    %c0_0 = arith.constant 0 : index
    %0 = vector.load %arg5[%c0, %c0_0] : memref<8x128xf32, #tpu.memory_space<vmem>>, vector<8x128xf32>
    %c0_1 = arith.constant 0 : index
    %c0_2 = arith.constant 0 : index
    %1 = vector.load %arg6[%c0_1, %c0_2] : memref<8x128xf32, #tpu.memory_space<vmem>>, vector<8x128xf32>
    %c0_3 = arith.constant 0 : index
    %2 = memref.load %arg4[%c0_3] : memref<3xf32, #tpu.memory_space<smem>>
    %3 = vector.broadcast %2 : f32 to vector<8x128xf32>
    %4 = arith.subf %1, %3 : vector<8x128xf32>
    %c1 = arith.constant 1 : index
    %5 = memref.load %arg4[%c1] : memref<3xf32, #tpu.memory_space<smem>>
    %6 = vector.broadcast %5 : f32 to vector<8x128xf32>
    %7 = arith.subf %1, %6 : vector<8x128xf32>
    %c2 = arith.constant 2 : index
    %8 = memref.load %arg4[%c2] : memref<3xf32, #tpu.memory_space<smem>>
    %9 = vector.broadcast %8 : f32 to vector<8x128xf32>
    %10 = arith.subf %1, %9 : vector<8x128xf32>
    %c0_4 = arith.constant 0 : index
    %11 = memref.load %arg1[%c0_4] : memref<32xf32, #tpu.memory_space<smem>>
    %12 = vector.broadcast %11 : f32 to vector<8x128xf32>
    %13 = arith.mulf %12, %0 : vector<8x128xf32>
    %c0_5 = arith.constant 0 : index
    %14 = memref.load %arg2[%c0_5] : memref<32xf32, #tpu.memory_space<smem>>
    %15 = vector.broadcast %14 : f32 to vector<8x128xf32>
    %16 = arith.addf %13, %15 : vector<8x128xf32>
    %cst = arith.constant 0.000000e+00 : f32
    %17 = vector.broadcast %cst : f32 to vector<8x128xf32>
    %18 = arith.maximumf %16, %17 : vector<8x128xf32>
    %c0_6 = arith.constant 0 : index
    %19 = memref.load %arg3[%c0_6] : memref<96xf32, #tpu.memory_space<smem>>
    %20 = vector.broadcast %19 : f32 to vector<8x128xf32>
    %21 = arith.mulf %20, %18 : vector<8x128xf32>
    %c1_7 = arith.constant 1 : index
    %22 = memref.load %arg3[%c1_7] : memref<96xf32, #tpu.memory_space<smem>>
    %23 = vector.broadcast %22 : f32 to vector<8x128xf32>
    %24 = arith.mulf %23, %18 : vector<8x128xf32>
    %c2_8 = arith.constant 2 : index
    %25 = memref.load %arg3[%c2_8] : memref<96xf32, #tpu.memory_space<smem>>
    %26 = vector.broadcast %25 : f32 to vector<8x128xf32>
    %27 = arith.mulf %26, %18 : vector<8x128xf32>
    %c1_9 = arith.constant 1 : index
    %28 = memref.load %arg1[%c1_9] : memref<32xf32, #tpu.memory_space<smem>>
    %29 = vector.broadcast %28 : f32 to vector<8x128xf32>
    %30 = arith.mulf %29, %0 : vector<8x128xf32>
    %c1_10 = arith.constant 1 : index
    %31 = memref.load %arg2[%c1_10] : memref<32xf32, #tpu.memory_space<smem>>
    %32 = vector.broadcast %31 : f32 to vector<8x128xf32>
    %33 = arith.addf %30, %32 : vector<8x128xf32>
    %cst_11 = arith.constant 0.000000e+00 : f32
    %34 = vector.broadcast %cst_11 : f32 to vector<8x128xf32>
    %35 = arith.maximumf %33, %34 : vector<8x128xf32>
    %c3 = arith.constant 3 : index
    %36 = memref.load %arg3[%c3] : memref<96xf32, #tpu.memory_space<smem>>
    %37 = vector.broadcast %36 : f32 to vector<8x128xf32>
    %38 = arith.mulf %37, %35 : vector<8x128xf32>
    %39 = arith.addf %21, %38 : vector<8x128xf32>
    %c4 = arith.constant 4 : index
    %40 = memref.load %arg3[%c4] : memref<96xf32, #tpu.memory_space<smem>>
    %41 = vector.broadcast %40 : f32 to vector<8x128xf32>
    %42 = arith.mulf %41, %35 : vector<8x128xf32>
    %43 = arith.addf %24, %42 : vector<8x128xf32>
    %c5 = arith.constant 5 : index
    %44 = memref.load %arg3[%c5] : memref<96xf32, #tpu.memory_space<smem>>
    %45 = vector.broadcast %44 : f32 to vector<8x128xf32>
    %46 = arith.mulf %45, %35 : vector<8x128xf32>
    %47 = arith.addf %27, %46 : vector<8x128xf32>
    %c2_12 = arith.constant 2 : index
    %48 = memref.load %arg1[%c2_12] : memref<32xf32, #tpu.memory_space<smem>>
    %49 = vector.broadcast %48 : f32 to vector<8x128xf32>
    %50 = arith.mulf %49, %0 : vector<8x128xf32>
    %c2_13 = arith.constant 2 : index
    %51 = memref.load %arg2[%c2_13] : memref<32xf32, #tpu.memory_space<smem>>
    %52 = vector.broadcast %51 : f32 to vector<8x128xf32>
    %53 = arith.addf %50, %52 : vector<8x128xf32>
    %cst_14 = arith.constant 0.000000e+00 : f32
    %54 = vector.broadcast %cst_14 : f32 to vector<8x128xf32>
    %55 = arith.maximumf %53, %54 : vector<8x128xf32>
    %c6 = arith.constant 6 : index
    %56 = memref.load %arg3[%c6] : memref<96xf32, #tpu.memory_space<smem>>
    %57 = vector.broadcast %56 : f32 to vector<8x128xf32>
    %58 = arith.mulf %57, %55 : vector<8x128xf32>
    %59 = arith.addf %39, %58 : vector<8x128xf32>
    %c7 = arith.constant 7 : index
    %60 = memref.load %arg3[%c7] : memref<96xf32, #tpu.memory_space<smem>>
    %61 = vector.broadcast %60 : f32 to vector<8x128xf32>
    %62 = arith.mulf %61, %55 : vector<8x128xf32>
    %63 = arith.addf %43, %62 : vector<8x128xf32>
    %c8 = arith.constant 8 : index
    %64 = memref.load %arg3[%c8] : memref<96xf32, #tpu.memory_space<smem>>
    %65 = vector.broadcast %64 : f32 to vector<8x128xf32>
    %66 = arith.mulf %65, %55 : vector<8x128xf32>
    %67 = arith.addf %47, %66 : vector<8x128xf32>
    %c3_15 = arith.constant 3 : index
    %68 = memref.load %arg1[%c3_15] : memref<32xf32, #tpu.memory_space<smem>>
    %69 = vector.broadcast %68 : f32 to vector<8x128xf32>
    %70 = arith.mulf %69, %0 : vector<8x128xf32>
    %c3_16 = arith.constant 3 : index
    %71 = memref.load %arg2[%c3_16] : memref<32xf32, #tpu.memory_space<smem>>
    %72 = vector.broadcast %71 : f32 to vector<8x128xf32>
    %73 = arith.addf %70, %72 : vector<8x128xf32>
    %cst_17 = arith.constant 0.000000e+00 : f32
    %74 = vector.broadcast %cst_17 : f32 to vector<8x128xf32>
    %75 = arith.maximumf %73, %74 : vector<8x128xf32>
    %c9 = arith.constant 9 : index
    %76 = memref.load %arg3[%c9] : memref<96xf32, #tpu.memory_space<smem>>
    %77 = vector.broadcast %76 : f32 to vector<8x128xf32>
    %78 = arith.mulf %77, %75 : vector<8x128xf32>
    %79 = arith.addf %59, %78 : vector<8x128xf32>
    %c10 = arith.constant 10 : index
    %80 = memref.load %arg3[%c10] : memref<96xf32, #tpu.memory_space<smem>>
    %81 = vector.broadcast %80 : f32 to vector<8x128xf32>
    %82 = arith.mulf %81, %75 : vector<8x128xf32>
    %83 = arith.addf %63, %82 : vector<8x128xf32>
    %c11 = arith.constant 11 : index
    %84 = memref.load %arg3[%c11] : memref<96xf32, #tpu.memory_space<smem>>
    %85 = vector.broadcast %84 : f32 to vector<8x128xf32>
    %86 = arith.mulf %85, %75 : vector<8x128xf32>
    %87 = arith.addf %67, %86 : vector<8x128xf32>
    %c4_18 = arith.constant 4 : index
    %88 = memref.load %arg1[%c4_18] : memref<32xf32, #tpu.memory_space<smem>>
    %89 = vector.broadcast %88 : f32 to vector<8x128xf32>
    %90 = arith.mulf %89, %0 : vector<8x128xf32>
    %c4_19 = arith.constant 4 : index
    %91 = memref.load %arg2[%c4_19] : memref<32xf32, #tpu.memory_space<smem>>
    %92 = vector.broadcast %91 : f32 to vector<8x128xf32>
    %93 = arith.addf %90, %92 : vector<8x128xf32>
    %cst_20 = arith.constant 0.000000e+00 : f32
    %94 = vector.broadcast %cst_20 : f32 to vector<8x128xf32>
    %95 = arith.maximumf %93, %94 : vector<8x128xf32>
    %c12 = arith.constant 12 : index
    %96 = memref.load %arg3[%c12] : memref<96xf32, #tpu.memory_space<smem>>
    %97 = vector.broadcast %96 : f32 to vector<8x128xf32>
    %98 = arith.mulf %97, %95 : vector<8x128xf32>
    %99 = arith.addf %79, %98 : vector<8x128xf32>
    %c13 = arith.constant 13 : index
    %100 = memref.load %arg3[%c13] : memref<96xf32, #tpu.memory_space<smem>>
    %101 = vector.broadcast %100 : f32 to vector<8x128xf32>
    %102 = arith.mulf %101, %95 : vector<8x128xf32>
    %103 = arith.addf %83, %102 : vector<8x128xf32>
    %c14 = arith.constant 14 : index
    %104 = memref.load %arg3[%c14] : memref<96xf32, #tpu.memory_space<smem>>
    %105 = vector.broadcast %104 : f32 to vector<8x128xf32>
    %106 = arith.mulf %105, %95 : vector<8x128xf32>
    %107 = arith.addf %87, %106 : vector<8x128xf32>
    %c5_21 = arith.constant 5 : index
    %108 = memref.load %arg1[%c5_21] : memref<32xf32, #tpu.memory_space<smem>>
    %109 = vector.broadcast %108 : f32 to vector<8x128xf32>
    %110 = arith.mulf %109, %0 : vector<8x128xf32>
    %c5_22 = arith.constant 5 : index
    %111 = memref.load %arg2[%c5_22] : memref<32xf32, #tpu.memory_space<smem>>
    %112 = vector.broadcast %111 : f32 to vector<8x128xf32>
    %113 = arith.addf %110, %112 : vector<8x128xf32>
    %cst_23 = arith.constant 0.000000e+00 : f32
    %114 = vector.broadcast %cst_23 : f32 to vector<8x128xf32>
    %115 = arith.maximumf %113, %114 : vector<8x128xf32>
    %c15 = arith.constant 15 : index
    %116 = memref.load %arg3[%c15] : memref<96xf32, #tpu.memory_space<smem>>
    %117 = vector.broadcast %116 : f32 to vector<8x128xf32>
    %118 = arith.mulf %117, %115 : vector<8x128xf32>
    %119 = arith.addf %99, %118 : vector<8x128xf32>
    %c16 = arith.constant 16 : index
    %120 = memref.load %arg3[%c16] : memref<96xf32, #tpu.memory_space<smem>>
    %121 = vector.broadcast %120 : f32 to vector<8x128xf32>
    %122 = arith.mulf %121, %115 : vector<8x128xf32>
    %123 = arith.addf %103, %122 : vector<8x128xf32>
    %c17 = arith.constant 17 : index
    %124 = memref.load %arg3[%c17] : memref<96xf32, #tpu.memory_space<smem>>
    %125 = vector.broadcast %124 : f32 to vector<8x128xf32>
    %126 = arith.mulf %125, %115 : vector<8x128xf32>
    %127 = arith.addf %107, %126 : vector<8x128xf32>
    %c6_24 = arith.constant 6 : index
    %128 = memref.load %arg1[%c6_24] : memref<32xf32, #tpu.memory_space<smem>>
    %129 = vector.broadcast %128 : f32 to vector<8x128xf32>
    %130 = arith.mulf %129, %0 : vector<8x128xf32>
    %c6_25 = arith.constant 6 : index
    %131 = memref.load %arg2[%c6_25] : memref<32xf32, #tpu.memory_space<smem>>
    %132 = vector.broadcast %131 : f32 to vector<8x128xf32>
    %133 = arith.addf %130, %132 : vector<8x128xf32>
    %cst_26 = arith.constant 0.000000e+00 : f32
    %134 = vector.broadcast %cst_26 : f32 to vector<8x128xf32>
    %135 = arith.maximumf %133, %134 : vector<8x128xf32>
    %c18 = arith.constant 18 : index
    %136 = memref.load %arg3[%c18] : memref<96xf32, #tpu.memory_space<smem>>
    %137 = vector.broadcast %136 : f32 to vector<8x128xf32>
    %138 = arith.mulf %137, %135 : vector<8x128xf32>
    %139 = arith.addf %119, %138 : vector<8x128xf32>
    %c19 = arith.constant 19 : index
    %140 = memref.load %arg3[%c19] : memref<96xf32, #tpu.memory_space<smem>>
    %141 = vector.broadcast %140 : f32 to vector<8x128xf32>
    %142 = arith.mulf %141, %135 : vector<8x128xf32>
    %143 = arith.addf %123, %142 : vector<8x128xf32>
    %c20 = arith.constant 20 : index
    %144 = memref.load %arg3[%c20] : memref<96xf32, #tpu.memory_space<smem>>
    %145 = vector.broadcast %144 : f32 to vector<8x128xf32>
    %146 = arith.mulf %145, %135 : vector<8x128xf32>
    %147 = arith.addf %127, %146 : vector<8x128xf32>
    %c7_27 = arith.constant 7 : index
    %148 = memref.load %arg1[%c7_27] : memref<32xf32, #tpu.memory_space<smem>>
    %149 = vector.broadcast %148 : f32 to vector<8x128xf32>
    %150 = arith.mulf %149, %0 : vector<8x128xf32>
    %c7_28 = arith.constant 7 : index
    %151 = memref.load %arg2[%c7_28] : memref<32xf32, #tpu.memory_space<smem>>
    %152 = vector.broadcast %151 : f32 to vector<8x128xf32>
    %153 = arith.addf %150, %152 : vector<8x128xf32>
    %cst_29 = arith.constant 0.000000e+00 : f32
    %154 = vector.broadcast %cst_29 : f32 to vector<8x128xf32>
    %155 = arith.maximumf %153, %154 : vector<8x128xf32>
    %c21 = arith.constant 21 : index
    %156 = memref.load %arg3[%c21] : memref<96xf32, #tpu.memory_space<smem>>
    %157 = vector.broadcast %156 : f32 to vector<8x128xf32>
    %158 = arith.mulf %157, %155 : vector<8x128xf32>
    %159 = arith.addf %139, %158 : vector<8x128xf32>
    %c22 = arith.constant 22 : index
    %160 = memref.load %arg3[%c22] : memref<96xf32, #tpu.memory_space<smem>>
    %161 = vector.broadcast %160 : f32 to vector<8x128xf32>
    %162 = arith.mulf %161, %155 : vector<8x128xf32>
    %163 = arith.addf %143, %162 : vector<8x128xf32>
    %c23 = arith.constant 23 : index
    %164 = memref.load %arg3[%c23] : memref<96xf32, #tpu.memory_space<smem>>
    %165 = vector.broadcast %164 : f32 to vector<8x128xf32>
    %166 = arith.mulf %165, %155 : vector<8x128xf32>
    %167 = arith.addf %147, %166 : vector<8x128xf32>
    %c8_30 = arith.constant 8 : index
    %168 = memref.load %arg1[%c8_30] : memref<32xf32, #tpu.memory_space<smem>>
    %169 = vector.broadcast %168 : f32 to vector<8x128xf32>
    %170 = arith.mulf %169, %0 : vector<8x128xf32>
    %c8_31 = arith.constant 8 : index
    %171 = memref.load %arg2[%c8_31] : memref<32xf32, #tpu.memory_space<smem>>
    %172 = vector.broadcast %171 : f32 to vector<8x128xf32>
    %173 = arith.addf %170, %172 : vector<8x128xf32>
    %cst_32 = arith.constant 0.000000e+00 : f32
    %174 = vector.broadcast %cst_32 : f32 to vector<8x128xf32>
    %175 = arith.maximumf %173, %174 : vector<8x128xf32>
    %c24 = arith.constant 24 : index
    %176 = memref.load %arg3[%c24] : memref<96xf32, #tpu.memory_space<smem>>
    %177 = vector.broadcast %176 : f32 to vector<8x128xf32>
    %178 = arith.mulf %177, %175 : vector<8x128xf32>
    %179 = arith.addf %159, %178 : vector<8x128xf32>
    %c25 = arith.constant 25 : index
    %180 = memref.load %arg3[%c25] : memref<96xf32, #tpu.memory_space<smem>>
    %181 = vector.broadcast %180 : f32 to vector<8x128xf32>
    %182 = arith.mulf %181, %175 : vector<8x128xf32>
    %183 = arith.addf %163, %182 : vector<8x128xf32>
    %c26 = arith.constant 26 : index
    %184 = memref.load %arg3[%c26] : memref<96xf32, #tpu.memory_space<smem>>
    %185 = vector.broadcast %184 : f32 to vector<8x128xf32>
    %186 = arith.mulf %185, %175 : vector<8x128xf32>
    %187 = arith.addf %167, %186 : vector<8x128xf32>
    %c9_33 = arith.constant 9 : index
    %188 = memref.load %arg1[%c9_33] : memref<32xf32, #tpu.memory_space<smem>>
    %189 = vector.broadcast %188 : f32 to vector<8x128xf32>
    %190 = arith.mulf %189, %0 : vector<8x128xf32>
    %c9_34 = arith.constant 9 : index
    %191 = memref.load %arg2[%c9_34] : memref<32xf32, #tpu.memory_space<smem>>
    %192 = vector.broadcast %191 : f32 to vector<8x128xf32>
    %193 = arith.addf %190, %192 : vector<8x128xf32>
    %cst_35 = arith.constant 0.000000e+00 : f32
    %194 = vector.broadcast %cst_35 : f32 to vector<8x128xf32>
    %195 = arith.maximumf %193, %194 : vector<8x128xf32>
    %c27 = arith.constant 27 : index
    %196 = memref.load %arg3[%c27] : memref<96xf32, #tpu.memory_space<smem>>
    %197 = vector.broadcast %196 : f32 to vector<8x128xf32>
    %198 = arith.mulf %197, %195 : vector<8x128xf32>
    %199 = arith.addf %179, %198 : vector<8x128xf32>
    %c28 = arith.constant 28 : index
    %200 = memref.load %arg3[%c28] : memref<96xf32, #tpu.memory_space<smem>>
    %201 = vector.broadcast %200 : f32 to vector<8x128xf32>
    %202 = arith.mulf %201, %195 : vector<8x128xf32>
    %203 = arith.addf %183, %202 : vector<8x128xf32>
    %c29 = arith.constant 29 : index
    %204 = memref.load %arg3[%c29] : memref<96xf32, #tpu.memory_space<smem>>
    %205 = vector.broadcast %204 : f32 to vector<8x128xf32>
    %206 = arith.mulf %205, %195 : vector<8x128xf32>
    %207 = arith.addf %187, %206 : vector<8x128xf32>
    %c10_36 = arith.constant 10 : index
    %208 = memref.load %arg1[%c10_36] : memref<32xf32, #tpu.memory_space<smem>>
    %209 = vector.broadcast %208 : f32 to vector<8x128xf32>
    %210 = arith.mulf %209, %0 : vector<8x128xf32>
    %c10_37 = arith.constant 10 : index
    %211 = memref.load %arg2[%c10_37] : memref<32xf32, #tpu.memory_space<smem>>
    %212 = vector.broadcast %211 : f32 to vector<8x128xf32>
    %213 = arith.addf %210, %212 : vector<8x128xf32>
    %cst_38 = arith.constant 0.000000e+00 : f32
    %214 = vector.broadcast %cst_38 : f32 to vector<8x128xf32>
    %215 = arith.maximumf %213, %214 : vector<8x128xf32>
    %c30 = arith.constant 30 : index
    %216 = memref.load %arg3[%c30] : memref<96xf32, #tpu.memory_space<smem>>
    %217 = vector.broadcast %216 : f32 to vector<8x128xf32>
    %218 = arith.mulf %217, %215 : vector<8x128xf32>
    %219 = arith.addf %199, %218 : vector<8x128xf32>
    %c31 = arith.constant 31 : index
    %220 = memref.load %arg3[%c31] : memref<96xf32, #tpu.memory_space<smem>>
    %221 = vector.broadcast %220 : f32 to vector<8x128xf32>
    %222 = arith.mulf %221, %215 : vector<8x128xf32>
    %223 = arith.addf %203, %222 : vector<8x128xf32>
    %c32 = arith.constant 32 : index
    %224 = memref.load %arg3[%c32] : memref<96xf32, #tpu.memory_space<smem>>
    %225 = vector.broadcast %224 : f32 to vector<8x128xf32>
    %226 = arith.mulf %225, %215 : vector<8x128xf32>
    %227 = arith.addf %207, %226 : vector<8x128xf32>
    %c11_39 = arith.constant 11 : index
    %228 = memref.load %arg1[%c11_39] : memref<32xf32, #tpu.memory_space<smem>>
    %229 = vector.broadcast %228 : f32 to vector<8x128xf32>
    %230 = arith.mulf %229, %0 : vector<8x128xf32>
    %c11_40 = arith.constant 11 : index
    %231 = memref.load %arg2[%c11_40] : memref<32xf32, #tpu.memory_space<smem>>
    %232 = vector.broadcast %231 : f32 to vector<8x128xf32>
    %233 = arith.addf %230, %232 : vector<8x128xf32>
    %cst_41 = arith.constant 0.000000e+00 : f32
    %234 = vector.broadcast %cst_41 : f32 to vector<8x128xf32>
    %235 = arith.maximumf %233, %234 : vector<8x128xf32>
    %c33 = arith.constant 33 : index
    %236 = memref.load %arg3[%c33] : memref<96xf32, #tpu.memory_space<smem>>
    %237 = vector.broadcast %236 : f32 to vector<8x128xf32>
    %238 = arith.mulf %237, %235 : vector<8x128xf32>
    %239 = arith.addf %219, %238 : vector<8x128xf32>
    %c34 = arith.constant 34 : index
    %240 = memref.load %arg3[%c34] : memref<96xf32, #tpu.memory_space<smem>>
    %241 = vector.broadcast %240 : f32 to vector<8x128xf32>
    %242 = arith.mulf %241, %235 : vector<8x128xf32>
    %243 = arith.addf %223, %242 : vector<8x128xf32>
    %c35 = arith.constant 35 : index
    %244 = memref.load %arg3[%c35] : memref<96xf32, #tpu.memory_space<smem>>
    %245 = vector.broadcast %244 : f32 to vector<8x128xf32>
    %246 = arith.mulf %245, %235 : vector<8x128xf32>
    %247 = arith.addf %227, %246 : vector<8x128xf32>
    %c12_42 = arith.constant 12 : index
    %248 = memref.load %arg1[%c12_42] : memref<32xf32, #tpu.memory_space<smem>>
    %249 = vector.broadcast %248 : f32 to vector<8x128xf32>
    %250 = arith.mulf %249, %0 : vector<8x128xf32>
    %c12_43 = arith.constant 12 : index
    %251 = memref.load %arg2[%c12_43] : memref<32xf32, #tpu.memory_space<smem>>
    %252 = vector.broadcast %251 : f32 to vector<8x128xf32>
    %253 = arith.addf %250, %252 : vector<8x128xf32>
    %cst_44 = arith.constant 0.000000e+00 : f32
    %254 = vector.broadcast %cst_44 : f32 to vector<8x128xf32>
    %255 = arith.maximumf %253, %254 : vector<8x128xf32>
    %c36 = arith.constant 36 : index
    %256 = memref.load %arg3[%c36] : memref<96xf32, #tpu.memory_space<smem>>
    %257 = vector.broadcast %256 : f32 to vector<8x128xf32>
    %258 = arith.mulf %257, %255 : vector<8x128xf32>
    %259 = arith.addf %239, %258 : vector<8x128xf32>
    %c37 = arith.constant 37 : index
    %260 = memref.load %arg3[%c37] : memref<96xf32, #tpu.memory_space<smem>>
    %261 = vector.broadcast %260 : f32 to vector<8x128xf32>
    %262 = arith.mulf %261, %255 : vector<8x128xf32>
    %263 = arith.addf %243, %262 : vector<8x128xf32>
    %c38 = arith.constant 38 : index
    %264 = memref.load %arg3[%c38] : memref<96xf32, #tpu.memory_space<smem>>
    %265 = vector.broadcast %264 : f32 to vector<8x128xf32>
    %266 = arith.mulf %265, %255 : vector<8x128xf32>
    %267 = arith.addf %247, %266 : vector<8x128xf32>
    %c13_45 = arith.constant 13 : index
    %268 = memref.load %arg1[%c13_45] : memref<32xf32, #tpu.memory_space<smem>>
    %269 = vector.broadcast %268 : f32 to vector<8x128xf32>
    %270 = arith.mulf %269, %0 : vector<8x128xf32>
    %c13_46 = arith.constant 13 : index
    %271 = memref.load %arg2[%c13_46] : memref<32xf32, #tpu.memory_space<smem>>
    %272 = vector.broadcast %271 : f32 to vector<8x128xf32>
    %273 = arith.addf %270, %272 : vector<8x128xf32>
    %cst_47 = arith.constant 0.000000e+00 : f32
    %274 = vector.broadcast %cst_47 : f32 to vector<8x128xf32>
    %275 = arith.maximumf %273, %274 : vector<8x128xf32>
    %c39 = arith.constant 39 : index
    %276 = memref.load %arg3[%c39] : memref<96xf32, #tpu.memory_space<smem>>
    %277 = vector.broadcast %276 : f32 to vector<8x128xf32>
    %278 = arith.mulf %277, %275 : vector<8x128xf32>
    %279 = arith.addf %259, %278 : vector<8x128xf32>
    %c40 = arith.constant 40 : index
    %280 = memref.load %arg3[%c40] : memref<96xf32, #tpu.memory_space<smem>>
    %281 = vector.broadcast %280 : f32 to vector<8x128xf32>
    %282 = arith.mulf %281, %275 : vector<8x128xf32>
    %283 = arith.addf %263, %282 : vector<8x128xf32>
    %c41 = arith.constant 41 : index
    %284 = memref.load %arg3[%c41] : memref<96xf32, #tpu.memory_space<smem>>
    %285 = vector.broadcast %284 : f32 to vector<8x128xf32>
    %286 = arith.mulf %285, %275 : vector<8x128xf32>
    %287 = arith.addf %267, %286 : vector<8x128xf32>
    %c14_48 = arith.constant 14 : index
    %288 = memref.load %arg1[%c14_48] : memref<32xf32, #tpu.memory_space<smem>>
    %289 = vector.broadcast %288 : f32 to vector<8x128xf32>
    %290 = arith.mulf %289, %0 : vector<8x128xf32>
    %c14_49 = arith.constant 14 : index
    %291 = memref.load %arg2[%c14_49] : memref<32xf32, #tpu.memory_space<smem>>
    %292 = vector.broadcast %291 : f32 to vector<8x128xf32>
    %293 = arith.addf %290, %292 : vector<8x128xf32>
    %cst_50 = arith.constant 0.000000e+00 : f32
    %294 = vector.broadcast %cst_50 : f32 to vector<8x128xf32>
    %295 = arith.maximumf %293, %294 : vector<8x128xf32>
    %c42 = arith.constant 42 : index
    %296 = memref.load %arg3[%c42] : memref<96xf32, #tpu.memory_space<smem>>
    %297 = vector.broadcast %296 : f32 to vector<8x128xf32>
    %298 = arith.mulf %297, %295 : vector<8x128xf32>
    %299 = arith.addf %279, %298 : vector<8x128xf32>
    %c43 = arith.constant 43 : index
    %300 = memref.load %arg3[%c43] : memref<96xf32, #tpu.memory_space<smem>>
    %301 = vector.broadcast %300 : f32 to vector<8x128xf32>
    %302 = arith.mulf %301, %295 : vector<8x128xf32>
    %303 = arith.addf %283, %302 : vector<8x128xf32>
    %c44 = arith.constant 44 : index
    %304 = memref.load %arg3[%c44] : memref<96xf32, #tpu.memory_space<smem>>
    %305 = vector.broadcast %304 : f32 to vector<8x128xf32>
    %306 = arith.mulf %305, %295 : vector<8x128xf32>
    %307 = arith.addf %287, %306 : vector<8x128xf32>
    %c15_51 = arith.constant 15 : index
    %308 = memref.load %arg1[%c15_51] : memref<32xf32, #tpu.memory_space<smem>>
    %309 = vector.broadcast %308 : f32 to vector<8x128xf32>
    %310 = arith.mulf %309, %0 : vector<8x128xf32>
    %c15_52 = arith.constant 15 : index
    %311 = memref.load %arg2[%c15_52] : memref<32xf32, #tpu.memory_space<smem>>
    %312 = vector.broadcast %311 : f32 to vector<8x128xf32>
    %313 = arith.addf %310, %312 : vector<8x128xf32>
    %cst_53 = arith.constant 0.000000e+00 : f32
    %314 = vector.broadcast %cst_53 : f32 to vector<8x128xf32>
    %315 = arith.maximumf %313, %314 : vector<8x128xf32>
    %c45 = arith.constant 45 : index
    %316 = memref.load %arg3[%c45] : memref<96xf32, #tpu.memory_space<smem>>
    %317 = vector.broadcast %316 : f32 to vector<8x128xf32>
    %318 = arith.mulf %317, %315 : vector<8x128xf32>
    %319 = arith.addf %299, %318 : vector<8x128xf32>
    %c46 = arith.constant 46 : index
    %320 = memref.load %arg3[%c46] : memref<96xf32, #tpu.memory_space<smem>>
    %321 = vector.broadcast %320 : f32 to vector<8x128xf32>
    %322 = arith.mulf %321, %315 : vector<8x128xf32>
    %323 = arith.addf %303, %322 : vector<8x128xf32>
    %c47 = arith.constant 47 : index
    %324 = memref.load %arg3[%c47] : memref<96xf32, #tpu.memory_space<smem>>
    %325 = vector.broadcast %324 : f32 to vector<8x128xf32>
    %326 = arith.mulf %325, %315 : vector<8x128xf32>
    %327 = arith.addf %307, %326 : vector<8x128xf32>
    %c16_54 = arith.constant 16 : index
    %328 = memref.load %arg1[%c16_54] : memref<32xf32, #tpu.memory_space<smem>>
    %329 = vector.broadcast %328 : f32 to vector<8x128xf32>
    %330 = arith.mulf %329, %0 : vector<8x128xf32>
    %c16_55 = arith.constant 16 : index
    %331 = memref.load %arg2[%c16_55] : memref<32xf32, #tpu.memory_space<smem>>
    %332 = vector.broadcast %331 : f32 to vector<8x128xf32>
    %333 = arith.addf %330, %332 : vector<8x128xf32>
    %cst_56 = arith.constant 0.000000e+00 : f32
    %334 = vector.broadcast %cst_56 : f32 to vector<8x128xf32>
    %335 = arith.maximumf %333, %334 : vector<8x128xf32>
    %c48 = arith.constant 48 : index
    %336 = memref.load %arg3[%c48] : memref<96xf32, #tpu.memory_space<smem>>
    %337 = vector.broadcast %336 : f32 to vector<8x128xf32>
    %338 = arith.mulf %337, %335 : vector<8x128xf32>
    %339 = arith.addf %319, %338 : vector<8x128xf32>
    %c49 = arith.constant 49 : index
    %340 = memref.load %arg3[%c49] : memref<96xf32, #tpu.memory_space<smem>>
    %341 = vector.broadcast %340 : f32 to vector<8x128xf32>
    %342 = arith.mulf %341, %335 : vector<8x128xf32>
    %343 = arith.addf %323, %342 : vector<8x128xf32>
    %c50 = arith.constant 50 : index
    %344 = memref.load %arg3[%c50] : memref<96xf32, #tpu.memory_space<smem>>
    %345 = vector.broadcast %344 : f32 to vector<8x128xf32>
    %346 = arith.mulf %345, %335 : vector<8x128xf32>
    %347 = arith.addf %327, %346 : vector<8x128xf32>
    %c17_57 = arith.constant 17 : index
    %348 = memref.load %arg1[%c17_57] : memref<32xf32, #tpu.memory_space<smem>>
    %349 = vector.broadcast %348 : f32 to vector<8x128xf32>
    %350 = arith.mulf %349, %0 : vector<8x128xf32>
    %c17_58 = arith.constant 17 : index
    %351 = memref.load %arg2[%c17_58] : memref<32xf32, #tpu.memory_space<smem>>
    %352 = vector.broadcast %351 : f32 to vector<8x128xf32>
    %353 = arith.addf %350, %352 : vector<8x128xf32>
    %cst_59 = arith.constant 0.000000e+00 : f32
    %354 = vector.broadcast %cst_59 : f32 to vector<8x128xf32>
    %355 = arith.maximumf %353, %354 : vector<8x128xf32>
    %c51 = arith.constant 51 : index
    %356 = memref.load %arg3[%c51] : memref<96xf32, #tpu.memory_space<smem>>
    %357 = vector.broadcast %356 : f32 to vector<8x128xf32>
    %358 = arith.mulf %357, %355 : vector<8x128xf32>
    %359 = arith.addf %339, %358 : vector<8x128xf32>
    %c52 = arith.constant 52 : index
    %360 = memref.load %arg3[%c52] : memref<96xf32, #tpu.memory_space<smem>>
    %361 = vector.broadcast %360 : f32 to vector<8x128xf32>
    %362 = arith.mulf %361, %355 : vector<8x128xf32>
    %363 = arith.addf %343, %362 : vector<8x128xf32>
    %c53 = arith.constant 53 : index
    %364 = memref.load %arg3[%c53] : memref<96xf32, #tpu.memory_space<smem>>
    %365 = vector.broadcast %364 : f32 to vector<8x128xf32>
    %366 = arith.mulf %365, %355 : vector<8x128xf32>
    %367 = arith.addf %347, %366 : vector<8x128xf32>
    %c18_60 = arith.constant 18 : index
    %368 = memref.load %arg1[%c18_60] : memref<32xf32, #tpu.memory_space<smem>>
    %369 = vector.broadcast %368 : f32 to vector<8x128xf32>
    %370 = arith.mulf %369, %0 : vector<8x128xf32>
    %c18_61 = arith.constant 18 : index
    %371 = memref.load %arg2[%c18_61] : memref<32xf32, #tpu.memory_space<smem>>
    %372 = vector.broadcast %371 : f32 to vector<8x128xf32>
    %373 = arith.addf %370, %372 : vector<8x128xf32>
    %cst_62 = arith.constant 0.000000e+00 : f32
    %374 = vector.broadcast %cst_62 : f32 to vector<8x128xf32>
    %375 = arith.maximumf %373, %374 : vector<8x128xf32>
    %c54 = arith.constant 54 : index
    %376 = memref.load %arg3[%c54] : memref<96xf32, #tpu.memory_space<smem>>
    %377 = vector.broadcast %376 : f32 to vector<8x128xf32>
    %378 = arith.mulf %377, %375 : vector<8x128xf32>
    %379 = arith.addf %359, %378 : vector<8x128xf32>
    %c55 = arith.constant 55 : index
    %380 = memref.load %arg3[%c55] : memref<96xf32, #tpu.memory_space<smem>>
    %381 = vector.broadcast %380 : f32 to vector<8x128xf32>
    %382 = arith.mulf %381, %375 : vector<8x128xf32>
    %383 = arith.addf %363, %382 : vector<8x128xf32>
    %c56 = arith.constant 56 : index
    %384 = memref.load %arg3[%c56] : memref<96xf32, #tpu.memory_space<smem>>
    %385 = vector.broadcast %384 : f32 to vector<8x128xf32>
    %386 = arith.mulf %385, %375 : vector<8x128xf32>
    %387 = arith.addf %367, %386 : vector<8x128xf32>
    %c19_63 = arith.constant 19 : index
    %388 = memref.load %arg1[%c19_63] : memref<32xf32, #tpu.memory_space<smem>>
    %389 = vector.broadcast %388 : f32 to vector<8x128xf32>
    %390 = arith.mulf %389, %0 : vector<8x128xf32>
    %c19_64 = arith.constant 19 : index
    %391 = memref.load %arg2[%c19_64] : memref<32xf32, #tpu.memory_space<smem>>
    %392 = vector.broadcast %391 : f32 to vector<8x128xf32>
    %393 = arith.addf %390, %392 : vector<8x128xf32>
    %cst_65 = arith.constant 0.000000e+00 : f32
    %394 = vector.broadcast %cst_65 : f32 to vector<8x128xf32>
    %395 = arith.maximumf %393, %394 : vector<8x128xf32>
    %c57 = arith.constant 57 : index
    %396 = memref.load %arg3[%c57] : memref<96xf32, #tpu.memory_space<smem>>
    %397 = vector.broadcast %396 : f32 to vector<8x128xf32>
    %398 = arith.mulf %397, %395 : vector<8x128xf32>
    %399 = arith.addf %379, %398 : vector<8x128xf32>
    %c58 = arith.constant 58 : index
    %400 = memref.load %arg3[%c58] : memref<96xf32, #tpu.memory_space<smem>>
    %401 = vector.broadcast %400 : f32 to vector<8x128xf32>
    %402 = arith.mulf %401, %395 : vector<8x128xf32>
    %403 = arith.addf %383, %402 : vector<8x128xf32>
    %c59 = arith.constant 59 : index
    %404 = memref.load %arg3[%c59] : memref<96xf32, #tpu.memory_space<smem>>
    %405 = vector.broadcast %404 : f32 to vector<8x128xf32>
    %406 = arith.mulf %405, %395 : vector<8x128xf32>
    %407 = arith.addf %387, %406 : vector<8x128xf32>
    %c20_66 = arith.constant 20 : index
    %408 = memref.load %arg1[%c20_66] : memref<32xf32, #tpu.memory_space<smem>>
    %409 = vector.broadcast %408 : f32 to vector<8x128xf32>
    %410 = arith.mulf %409, %0 : vector<8x128xf32>
    %c20_67 = arith.constant 20 : index
    %411 = memref.load %arg2[%c20_67] : memref<32xf32, #tpu.memory_space<smem>>
    %412 = vector.broadcast %411 : f32 to vector<8x128xf32>
    %413 = arith.addf %410, %412 : vector<8x128xf32>
    %cst_68 = arith.constant 0.000000e+00 : f32
    %414 = vector.broadcast %cst_68 : f32 to vector<8x128xf32>
    %415 = arith.maximumf %413, %414 : vector<8x128xf32>
    %c60 = arith.constant 60 : index
    %416 = memref.load %arg3[%c60] : memref<96xf32, #tpu.memory_space<smem>>
    %417 = vector.broadcast %416 : f32 to vector<8x128xf32>
    %418 = arith.mulf %417, %415 : vector<8x128xf32>
    %419 = arith.addf %399, %418 : vector<8x128xf32>
    %c61 = arith.constant 61 : index
    %420 = memref.load %arg3[%c61] : memref<96xf32, #tpu.memory_space<smem>>
    %421 = vector.broadcast %420 : f32 to vector<8x128xf32>
    %422 = arith.mulf %421, %415 : vector<8x128xf32>
    %423 = arith.addf %403, %422 : vector<8x128xf32>
    %c62 = arith.constant 62 : index
    %424 = memref.load %arg3[%c62] : memref<96xf32, #tpu.memory_space<smem>>
    %425 = vector.broadcast %424 : f32 to vector<8x128xf32>
    %426 = arith.mulf %425, %415 : vector<8x128xf32>
    %427 = arith.addf %407, %426 : vector<8x128xf32>
    %c21_69 = arith.constant 21 : index
    %428 = memref.load %arg1[%c21_69] : memref<32xf32, #tpu.memory_space<smem>>
    %429 = vector.broadcast %428 : f32 to vector<8x128xf32>
    %430 = arith.mulf %429, %0 : vector<8x128xf32>
    %c21_70 = arith.constant 21 : index
    %431 = memref.load %arg2[%c21_70] : memref<32xf32, #tpu.memory_space<smem>>
    %432 = vector.broadcast %431 : f32 to vector<8x128xf32>
    %433 = arith.addf %430, %432 : vector<8x128xf32>
    %cst_71 = arith.constant 0.000000e+00 : f32
    %434 = vector.broadcast %cst_71 : f32 to vector<8x128xf32>
    %435 = arith.maximumf %433, %434 : vector<8x128xf32>
    %c63 = arith.constant 63 : index
    %436 = memref.load %arg3[%c63] : memref<96xf32, #tpu.memory_space<smem>>
    %437 = vector.broadcast %436 : f32 to vector<8x128xf32>
    %438 = arith.mulf %437, %435 : vector<8x128xf32>
    %439 = arith.addf %419, %438 : vector<8x128xf32>
    %c64 = arith.constant 64 : index
    %440 = memref.load %arg3[%c64] : memref<96xf32, #tpu.memory_space<smem>>
    %441 = vector.broadcast %440 : f32 to vector<8x128xf32>
    %442 = arith.mulf %441, %435 : vector<8x128xf32>
    %443 = arith.addf %423, %442 : vector<8x128xf32>
    %c65 = arith.constant 65 : index
    %444 = memref.load %arg3[%c65] : memref<96xf32, #tpu.memory_space<smem>>
    %445 = vector.broadcast %444 : f32 to vector<8x128xf32>
    %446 = arith.mulf %445, %435 : vector<8x128xf32>
    %447 = arith.addf %427, %446 : vector<8x128xf32>
    %c22_72 = arith.constant 22 : index
    %448 = memref.load %arg1[%c22_72] : memref<32xf32, #tpu.memory_space<smem>>
    %449 = vector.broadcast %448 : f32 to vector<8x128xf32>
    %450 = arith.mulf %449, %0 : vector<8x128xf32>
    %c22_73 = arith.constant 22 : index
    %451 = memref.load %arg2[%c22_73] : memref<32xf32, #tpu.memory_space<smem>>
    %452 = vector.broadcast %451 : f32 to vector<8x128xf32>
    %453 = arith.addf %450, %452 : vector<8x128xf32>
    %cst_74 = arith.constant 0.000000e+00 : f32
    %454 = vector.broadcast %cst_74 : f32 to vector<8x128xf32>
    %455 = arith.maximumf %453, %454 : vector<8x128xf32>
    %c66 = arith.constant 66 : index
    %456 = memref.load %arg3[%c66] : memref<96xf32, #tpu.memory_space<smem>>
    %457 = vector.broadcast %456 : f32 to vector<8x128xf32>
    %458 = arith.mulf %457, %455 : vector<8x128xf32>
    %459 = arith.addf %439, %458 : vector<8x128xf32>
    %c67 = arith.constant 67 : index
    %460 = memref.load %arg3[%c67] : memref<96xf32, #tpu.memory_space<smem>>
    %461 = vector.broadcast %460 : f32 to vector<8x128xf32>
    %462 = arith.mulf %461, %455 : vector<8x128xf32>
    %463 = arith.addf %443, %462 : vector<8x128xf32>
    %c68 = arith.constant 68 : index
    %464 = memref.load %arg3[%c68] : memref<96xf32, #tpu.memory_space<smem>>
    %465 = vector.broadcast %464 : f32 to vector<8x128xf32>
    %466 = arith.mulf %465, %455 : vector<8x128xf32>
    %467 = arith.addf %447, %466 : vector<8x128xf32>
    %c23_75 = arith.constant 23 : index
    %468 = memref.load %arg1[%c23_75] : memref<32xf32, #tpu.memory_space<smem>>
    %469 = vector.broadcast %468 : f32 to vector<8x128xf32>
    %470 = arith.mulf %469, %0 : vector<8x128xf32>
    %c23_76 = arith.constant 23 : index
    %471 = memref.load %arg2[%c23_76] : memref<32xf32, #tpu.memory_space<smem>>
    %472 = vector.broadcast %471 : f32 to vector<8x128xf32>
    %473 = arith.addf %470, %472 : vector<8x128xf32>
    %cst_77 = arith.constant 0.000000e+00 : f32
    %474 = vector.broadcast %cst_77 : f32 to vector<8x128xf32>
    %475 = arith.maximumf %473, %474 : vector<8x128xf32>
    %c69 = arith.constant 69 : index
    %476 = memref.load %arg3[%c69] : memref<96xf32, #tpu.memory_space<smem>>
    %477 = vector.broadcast %476 : f32 to vector<8x128xf32>
    %478 = arith.mulf %477, %475 : vector<8x128xf32>
    %479 = arith.addf %459, %478 : vector<8x128xf32>
    %c70 = arith.constant 70 : index
    %480 = memref.load %arg3[%c70] : memref<96xf32, #tpu.memory_space<smem>>
    %481 = vector.broadcast %480 : f32 to vector<8x128xf32>
    %482 = arith.mulf %481, %475 : vector<8x128xf32>
    %483 = arith.addf %463, %482 : vector<8x128xf32>
    %c71 = arith.constant 71 : index
    %484 = memref.load %arg3[%c71] : memref<96xf32, #tpu.memory_space<smem>>
    %485 = vector.broadcast %484 : f32 to vector<8x128xf32>
    %486 = arith.mulf %485, %475 : vector<8x128xf32>
    %487 = arith.addf %467, %486 : vector<8x128xf32>
    %c24_78 = arith.constant 24 : index
    %488 = memref.load %arg1[%c24_78] : memref<32xf32, #tpu.memory_space<smem>>
    %489 = vector.broadcast %488 : f32 to vector<8x128xf32>
    %490 = arith.mulf %489, %0 : vector<8x128xf32>
    %c24_79 = arith.constant 24 : index
    %491 = memref.load %arg2[%c24_79] : memref<32xf32, #tpu.memory_space<smem>>
    %492 = vector.broadcast %491 : f32 to vector<8x128xf32>
    %493 = arith.addf %490, %492 : vector<8x128xf32>
    %cst_80 = arith.constant 0.000000e+00 : f32
    %494 = vector.broadcast %cst_80 : f32 to vector<8x128xf32>
    %495 = arith.maximumf %493, %494 : vector<8x128xf32>
    %c72 = arith.constant 72 : index
    %496 = memref.load %arg3[%c72] : memref<96xf32, #tpu.memory_space<smem>>
    %497 = vector.broadcast %496 : f32 to vector<8x128xf32>
    %498 = arith.mulf %497, %495 : vector<8x128xf32>
    %499 = arith.addf %479, %498 : vector<8x128xf32>
    %c73 = arith.constant 73 : index
    %500 = memref.load %arg3[%c73] : memref<96xf32, #tpu.memory_space<smem>>
    %501 = vector.broadcast %500 : f32 to vector<8x128xf32>
    %502 = arith.mulf %501, %495 : vector<8x128xf32>
    %503 = arith.addf %483, %502 : vector<8x128xf32>
    %c74 = arith.constant 74 : index
    %504 = memref.load %arg3[%c74] : memref<96xf32, #tpu.memory_space<smem>>
    %505 = vector.broadcast %504 : f32 to vector<8x128xf32>
    %506 = arith.mulf %505, %495 : vector<8x128xf32>
    %507 = arith.addf %487, %506 : vector<8x128xf32>
    %c25_81 = arith.constant 25 : index
    %508 = memref.load %arg1[%c25_81] : memref<32xf32, #tpu.memory_space<smem>>
    %509 = vector.broadcast %508 : f32 to vector<8x128xf32>
    %510 = arith.mulf %509, %0 : vector<8x128xf32>
    %c25_82 = arith.constant 25 : index
    %511 = memref.load %arg2[%c25_82] : memref<32xf32, #tpu.memory_space<smem>>
    %512 = vector.broadcast %511 : f32 to vector<8x128xf32>
    %513 = arith.addf %510, %512 : vector<8x128xf32>
    %cst_83 = arith.constant 0.000000e+00 : f32
    %514 = vector.broadcast %cst_83 : f32 to vector<8x128xf32>
    %515 = arith.maximumf %513, %514 : vector<8x128xf32>
    %c75 = arith.constant 75 : index
    %516 = memref.load %arg3[%c75] : memref<96xf32, #tpu.memory_space<smem>>
    %517 = vector.broadcast %516 : f32 to vector<8x128xf32>
    %518 = arith.mulf %517, %515 : vector<8x128xf32>
    %519 = arith.addf %499, %518 : vector<8x128xf32>
    %c76 = arith.constant 76 : index
    %520 = memref.load %arg3[%c76] : memref<96xf32, #tpu.memory_space<smem>>
    %521 = vector.broadcast %520 : f32 to vector<8x128xf32>
    %522 = arith.mulf %521, %515 : vector<8x128xf32>
    %523 = arith.addf %503, %522 : vector<8x128xf32>
    %c77 = arith.constant 77 : index
    %524 = memref.load %arg3[%c77] : memref<96xf32, #tpu.memory_space<smem>>
    %525 = vector.broadcast %524 : f32 to vector<8x128xf32>
    %526 = arith.mulf %525, %515 : vector<8x128xf32>
    %527 = arith.addf %507, %526 : vector<8x128xf32>
    %c26_84 = arith.constant 26 : index
    %528 = memref.load %arg1[%c26_84] : memref<32xf32, #tpu.memory_space<smem>>
    %529 = vector.broadcast %528 : f32 to vector<8x128xf32>
    %530 = arith.mulf %529, %0 : vector<8x128xf32>
    %c26_85 = arith.constant 26 : index
    %531 = memref.load %arg2[%c26_85] : memref<32xf32, #tpu.memory_space<smem>>
    %532 = vector.broadcast %531 : f32 to vector<8x128xf32>
    %533 = arith.addf %530, %532 : vector<8x128xf32>
    %cst_86 = arith.constant 0.000000e+00 : f32
    %534 = vector.broadcast %cst_86 : f32 to vector<8x128xf32>
    %535 = arith.maximumf %533, %534 : vector<8x128xf32>
    %c78 = arith.constant 78 : index
    %536 = memref.load %arg3[%c78] : memref<96xf32, #tpu.memory_space<smem>>
    %537 = vector.broadcast %536 : f32 to vector<8x128xf32>
    %538 = arith.mulf %537, %535 : vector<8x128xf32>
    %539 = arith.addf %519, %538 : vector<8x128xf32>
    %c79 = arith.constant 79 : index
    %540 = memref.load %arg3[%c79] : memref<96xf32, #tpu.memory_space<smem>>
    %541 = vector.broadcast %540 : f32 to vector<8x128xf32>
    %542 = arith.mulf %541, %535 : vector<8x128xf32>
    %543 = arith.addf %523, %542 : vector<8x128xf32>
    %c80 = arith.constant 80 : index
    %544 = memref.load %arg3[%c80] : memref<96xf32, #tpu.memory_space<smem>>
    %545 = vector.broadcast %544 : f32 to vector<8x128xf32>
    %546 = arith.mulf %545, %535 : vector<8x128xf32>
    %547 = arith.addf %527, %546 : vector<8x128xf32>
    %c27_87 = arith.constant 27 : index
    %548 = memref.load %arg1[%c27_87] : memref<32xf32, #tpu.memory_space<smem>>
    %549 = vector.broadcast %548 : f32 to vector<8x128xf32>
    %550 = arith.mulf %549, %0 : vector<8x128xf32>
    %c27_88 = arith.constant 27 : index
    %551 = memref.load %arg2[%c27_88] : memref<32xf32, #tpu.memory_space<smem>>
    %552 = vector.broadcast %551 : f32 to vector<8x128xf32>
    %553 = arith.addf %550, %552 : vector<8x128xf32>
    %cst_89 = arith.constant 0.000000e+00 : f32
    %554 = vector.broadcast %cst_89 : f32 to vector<8x128xf32>
    %555 = arith.maximumf %553, %554 : vector<8x128xf32>
    %c81 = arith.constant 81 : index
    %556 = memref.load %arg3[%c81] : memref<96xf32, #tpu.memory_space<smem>>
    %557 = vector.broadcast %556 : f32 to vector<8x128xf32>
    %558 = arith.mulf %557, %555 : vector<8x128xf32>
    %559 = arith.addf %539, %558 : vector<8x128xf32>
    %c82 = arith.constant 82 : index
    %560 = memref.load %arg3[%c82] : memref<96xf32, #tpu.memory_space<smem>>
    %561 = vector.broadcast %560 : f32 to vector<8x128xf32>
    %562 = arith.mulf %561, %555 : vector<8x128xf32>
    %563 = arith.addf %543, %562 : vector<8x128xf32>
    %c83 = arith.constant 83 : index
    %564 = memref.load %arg3[%c83] : memref<96xf32, #tpu.memory_space<smem>>
    %565 = vector.broadcast %564 : f32 to vector<8x128xf32>
    %566 = arith.mulf %565, %555 : vector<8x128xf32>
    %567 = arith.addf %547, %566 : vector<8x128xf32>
    %c28_90 = arith.constant 28 : index
    %568 = memref.load %arg1[%c28_90] : memref<32xf32, #tpu.memory_space<smem>>
    %569 = vector.broadcast %568 : f32 to vector<8x128xf32>
    %570 = arith.mulf %569, %0 : vector<8x128xf32>
    %c28_91 = arith.constant 28 : index
    %571 = memref.load %arg2[%c28_91] : memref<32xf32, #tpu.memory_space<smem>>
    %572 = vector.broadcast %571 : f32 to vector<8x128xf32>
    %573 = arith.addf %570, %572 : vector<8x128xf32>
    %cst_92 = arith.constant 0.000000e+00 : f32
    %574 = vector.broadcast %cst_92 : f32 to vector<8x128xf32>
    %575 = arith.maximumf %573, %574 : vector<8x128xf32>
    %c84 = arith.constant 84 : index
    %576 = memref.load %arg3[%c84] : memref<96xf32, #tpu.memory_space<smem>>
    %577 = vector.broadcast %576 : f32 to vector<8x128xf32>
    %578 = arith.mulf %577, %575 : vector<8x128xf32>
    %579 = arith.addf %559, %578 : vector<8x128xf32>
    %c85 = arith.constant 85 : index
    %580 = memref.load %arg3[%c85] : memref<96xf32, #tpu.memory_space<smem>>
    %581 = vector.broadcast %580 : f32 to vector<8x128xf32>
    %582 = arith.mulf %581, %575 : vector<8x128xf32>
    %583 = arith.addf %563, %582 : vector<8x128xf32>
    %c86 = arith.constant 86 : index
    %584 = memref.load %arg3[%c86] : memref<96xf32, #tpu.memory_space<smem>>
    %585 = vector.broadcast %584 : f32 to vector<8x128xf32>
    %586 = arith.mulf %585, %575 : vector<8x128xf32>
    %587 = arith.addf %567, %586 : vector<8x128xf32>
    %c29_93 = arith.constant 29 : index
    %588 = memref.load %arg1[%c29_93] : memref<32xf32, #tpu.memory_space<smem>>
    %589 = vector.broadcast %588 : f32 to vector<8x128xf32>
    %590 = arith.mulf %589, %0 : vector<8x128xf32>
    %c29_94 = arith.constant 29 : index
    %591 = memref.load %arg2[%c29_94] : memref<32xf32, #tpu.memory_space<smem>>
    %592 = vector.broadcast %591 : f32 to vector<8x128xf32>
    %593 = arith.addf %590, %592 : vector<8x128xf32>
    %cst_95 = arith.constant 0.000000e+00 : f32
    %594 = vector.broadcast %cst_95 : f32 to vector<8x128xf32>
    %595 = arith.maximumf %593, %594 : vector<8x128xf32>
    %c87 = arith.constant 87 : index
    %596 = memref.load %arg3[%c87] : memref<96xf32, #tpu.memory_space<smem>>
    %597 = vector.broadcast %596 : f32 to vector<8x128xf32>
    %598 = arith.mulf %597, %595 : vector<8x128xf32>
    %599 = arith.addf %579, %598 : vector<8x128xf32>
    %c88 = arith.constant 88 : index
    %600 = memref.load %arg3[%c88] : memref<96xf32, #tpu.memory_space<smem>>
    %601 = vector.broadcast %600 : f32 to vector<8x128xf32>
    %602 = arith.mulf %601, %595 : vector<8x128xf32>
    %603 = arith.addf %583, %602 : vector<8x128xf32>
    %c89 = arith.constant 89 : index
    %604 = memref.load %arg3[%c89] : memref<96xf32, #tpu.memory_space<smem>>
    %605 = vector.broadcast %604 : f32 to vector<8x128xf32>
    %606 = arith.mulf %605, %595 : vector<8x128xf32>
    %607 = arith.addf %587, %606 : vector<8x128xf32>
    %c30_96 = arith.constant 30 : index
    %608 = memref.load %arg1[%c30_96] : memref<32xf32, #tpu.memory_space<smem>>
    %609 = vector.broadcast %608 : f32 to vector<8x128xf32>
    %610 = arith.mulf %609, %0 : vector<8x128xf32>
    %c30_97 = arith.constant 30 : index
    %611 = memref.load %arg2[%c30_97] : memref<32xf32, #tpu.memory_space<smem>>
    %612 = vector.broadcast %611 : f32 to vector<8x128xf32>
    %613 = arith.addf %610, %612 : vector<8x128xf32>
    %cst_98 = arith.constant 0.000000e+00 : f32
    %614 = vector.broadcast %cst_98 : f32 to vector<8x128xf32>
    %615 = arith.maximumf %613, %614 : vector<8x128xf32>
    %c90 = arith.constant 90 : index
    %616 = memref.load %arg3[%c90] : memref<96xf32, #tpu.memory_space<smem>>
    %617 = vector.broadcast %616 : f32 to vector<8x128xf32>
    %618 = arith.mulf %617, %615 : vector<8x128xf32>
    %619 = arith.addf %599, %618 : vector<8x128xf32>
    %c91 = arith.constant 91 : index
    %620 = memref.load %arg3[%c91] : memref<96xf32, #tpu.memory_space<smem>>
    %621 = vector.broadcast %620 : f32 to vector<8x128xf32>
    %622 = arith.mulf %621, %615 : vector<8x128xf32>
    %623 = arith.addf %603, %622 : vector<8x128xf32>
    %c92 = arith.constant 92 : index
    %624 = memref.load %arg3[%c92] : memref<96xf32, #tpu.memory_space<smem>>
    %625 = vector.broadcast %624 : f32 to vector<8x128xf32>
    %626 = arith.mulf %625, %615 : vector<8x128xf32>
    %627 = arith.addf %607, %626 : vector<8x128xf32>
    %c31_99 = arith.constant 31 : index
    %628 = memref.load %arg1[%c31_99] : memref<32xf32, #tpu.memory_space<smem>>
    %629 = vector.broadcast %628 : f32 to vector<8x128xf32>
    %630 = arith.mulf %629, %0 : vector<8x128xf32>
    %c31_100 = arith.constant 31 : index
    %631 = memref.load %arg2[%c31_100] : memref<32xf32, #tpu.memory_space<smem>>
    %632 = vector.broadcast %631 : f32 to vector<8x128xf32>
    %633 = arith.addf %630, %632 : vector<8x128xf32>
    %cst_101 = arith.constant 0.000000e+00 : f32
    %634 = vector.broadcast %cst_101 : f32 to vector<8x128xf32>
    %635 = arith.maximumf %633, %634 : vector<8x128xf32>
    %c93 = arith.constant 93 : index
    %636 = memref.load %arg3[%c93] : memref<96xf32, #tpu.memory_space<smem>>
    %637 = vector.broadcast %636 : f32 to vector<8x128xf32>
    %638 = arith.mulf %637, %635 : vector<8x128xf32>
    %639 = arith.addf %619, %638 : vector<8x128xf32>
    %c94 = arith.constant 94 : index
    %640 = memref.load %arg3[%c94] : memref<96xf32, #tpu.memory_space<smem>>
    %641 = vector.broadcast %640 : f32 to vector<8x128xf32>
    %642 = arith.mulf %641, %635 : vector<8x128xf32>
    %643 = arith.addf %623, %642 : vector<8x128xf32>
    %c95 = arith.constant 95 : index
    %644 = memref.load %arg3[%c95] : memref<96xf32, #tpu.memory_space<smem>>
    %645 = vector.broadcast %644 : f32 to vector<8x128xf32>
    %646 = arith.mulf %645, %635 : vector<8x128xf32>
    %647 = arith.addf %627, %646 : vector<8x128xf32>
    %648 = arith.cmpf olt, %639, %4 : vector<8x128xf32>
    %649 = arith.extui %648 : vector<8x128xi1> to vector<8x128xi32>
    %650 = arith.cmpf olt, %643, %7 : vector<8x128xf32>
    %651 = arith.extui %650 : vector<8x128xi1> to vector<8x128xi32>
    %652 = arith.addi %649, %651 : vector<8x128xi32>
    %653 = arith.cmpf olt, %647, %10 : vector<8x128xf32>
    %654 = arith.extui %653 : vector<8x128xi1> to vector<8x128xi32>
    %655 = arith.addi %652, %654 : vector<8x128xi32>
    %c0_102 = arith.constant 0 : index
    %c0_103 = arith.constant 0 : index
    %656 = vector.load %arg7[%c0_102, %c0_103] : memref<8x128xi32, #tpu.memory_space<vmem>>, vector<8x128xi32>
    tpu.vector_store %arg7[%c0_102, %c0_103], %655 {strides = array<i32>} : memref<8x128xi32, #tpu.memory_space<vmem>>, vector<8x128xi32>,
    return
  }
  func.func @transform_0(%arg0: i32) -> i32 {
    %c0_i32 = arith.constant 0 : i32
    %c0_i32_0 = arith.constant 0 : i32
    return %c0_i32 : i32
  }
  func.func @transform_1(%arg0: i32) -> i32 {
    %c0_i32 = arith.constant 0 : i32
    %c0_i32_0 = arith.constant 0 : i32
    return %c0_i32 : i32
  }
  func.func @transform_2(%arg0: i32) -> i32 {
    %c0_i32 = arith.constant 0 : i32
    %c0_i32_0 = arith.constant 0 : i32
    return %c0_i32 : i32
  }
  func.func @transform_3(%arg0: i32) -> i32 {
    %c0_i32 = arith.constant 0 : i32
    %c0_i32_0 = arith.constant 0 : i32
    return %c0_i32 : i32
  }
  func.func @transform_4(%arg0: i32) -> (i32, i32) {
    %c0_i32 = arith.constant 0 : i32
    %c0_i32_0 = arith.constant 0 : i32
    return %arg0, %c0_i32 : i32, i32
  }
  func.func @transform_5(%arg0: i32) -> (i32, i32) {
    %c0_i32 = arith.constant 0 : i32
    %c0_i32_0 = arith.constant 0 : i32
    return %arg0, %c0_i32 : i32, i32
  }
  func.func @transform_6(%arg0: i32) -> (i32, i32) {
    %c0_i32 = arith.constant 0 : i32
    %c0_i32_0 = arith.constant 0 : i32
    return %arg0, %c0_i32 : i32, i32
  }
}

</mosaic_0001>

<llo_original>
// kernel: tpu_custom_call.1
$region0: #{tpu_custom_call.1}
  #allocation0 [shape = 'u32[]', space=smem, size = 0x4, offset = 0x4, fixed_abs, tag = 'smem constant byte address 0x4 - core index']
  #allocation1 [shape = 'u32[72,128]{1,0:T(1,128)}', space=vmem, size = 0x9000, scoped, tag = 'internal scratch']
  %s0 = inlined_call_operand.hbm [shape: f32[32], index: 0, kind: input, shape index: {}]
  %s1 = inlined_call_operand.hbm [shape: f32[32], index: 1, kind: input, shape index: {}]
  %s2 = inlined_call_operand.vmem [shape: f32[96], index: 2, kind: input, shape index: {}]
  %s3 = inlined_call_operand.vmem [shape: f32[3], index: 3, kind: input, shape index: {}]
  %s4 = inlined_call_operand.hbm [shape: f32[8,128], index: 4, kind: input, shape index: {}]
  %s5 = inlined_call_operand.hbm [shape: f32[8,128], index: 5, kind: input, shape index: {}]
  %s6 = inlined_call_operand.hbm [shape: s32[8,128], index: 6, kind: output, shape index: {}]
  %s7 = sld [smem:[#allocation0]]
  $region58: #{tpu_custom_call.1} parent=0
    _
  %s9 = ssub.s32 1, %s7
  %s10 = scalar_select 0, %s9, %s7
  $region1: #{tpu_custom_call.1} parent=0
    #allocation2 [shape = 'u8[512]{0}', space=smem, size = 0x200, scoped, tag = 'input window, operand 0, single buffered']
    #allocation3 [shape = 's32[1]{0}', space=sflag, size = 0x4, scoped, tag = 'scoped memory for tpu_custom_call.1']
    #allocation4 [shape = 's32[1]{0}', space=sflag, size = 0x4, scoped, tag = 'scoped memory for tpu_custom_call.1']
    #allocation5 [shape = 's32[1]{0}', space=sflag, size = 0x4, scoped, tag = 'scoped memory for tpu_custom_call.1']
    #allocation6 [shape = 's32[1]{0}', space=sflag, size = 0x4, scoped, tag = 'scoped memory for tpu_custom_call.1']
    #allocation7 [shape = 'u8[512]{0}', space=smem, size = 0x200, scoped, tag = 'input window, operand 1, single buffered']
    #allocation8 [shape = 's32[1]{0}', space=sflag, size = 0x4, scoped, tag = 'scoped memory for tpu_custom_call.1']
    #allocation9 [shape = 'u8[512]{0}', space=smem, size = 0x200, scoped, tag = 'input window, operand 2, single buffered']
    #allocation10 [shape = 'u8[512]{0}', space=smem, size = 0x200, scoped, tag = 'input window, operand 3, single buffered']
    #allocation11 [shape = 's32[1]{0}', space=sflag, size = 0x4, scoped, tag = 'scoped memory for tpu_custom_call.1']
    #allocation12 [shape = 'u8[4096]{0}', space=vmem, size = 0x1000, scoped, tag = 'input window, operand 4, single buffered']
    #allocation13 [shape = 'u8[4096]{0}', space=vmem, size = 0x1000, scoped, tag = 'input window, operand 5, single buffered']
    #allocation14 [shape = 's32[1]{0}', space=sflag, size = 0x4, scoped, tag = 'scoped memory for tpu_custom_call.1']
    #allocation15 [shape = 'u8[4096]{0}', space=vmem, size = 0x1000, scoped, tag = 'output window, operand 0, single buffered']
    %11 = vsyncpa [#allocation5], 0
    %12 = vsyncpa [#allocation8], 0
    %13 = vsyncpa [#allocation6], 0
    %14 = vsyncpa [#allocation11], 0
    %15 = vsyncpa [#allocation3], 0
    %16 = vsyncpa [#allocation14], 0
    %17 = vsyncpa [#allocation4], 0
    // Predicated region
    $region2: #{tpu_custom_call.1} parent=1 // pred_check
      _
    $region3: #{tpu_custom_call.1} parent=1 // pred_check_branch
      %19 = sbr.rel (0) target = $region5
    $region4: #{tpu_custom_call.1} parent=1 // pred_region
      %21 = vsyncadd [#allocation5], 0
      %s23 = sshll.u32 %s0, 4
      %s24 = int_to_ptr.hbm [resolvable:$true] %s23
      %26 = dma.hbm_to_smem %s24, 16, [#allocation2], [#allocation5]
    $region5: #{tpu_custom_call.1} parent=1 // pred_fallthru
      _
    // Predicated region
    $region6: #{tpu_custom_call.1} parent=1 // pred_check
      _
    $region7: #{tpu_custom_call.1} parent=1 // pred_check_branch
      %28 = sbr.rel (0) target = $region9
    $region8: #{tpu_custom_call.1} parent=1 // pred_region
      %30 = vsyncadd [#allocation8], 0
      %s32 = sshll.u32 %s1, 4
      %s33 = int_to_ptr.hbm [resolvable:$true] %s32
      %35 = dma.hbm_to_smem %s33, 16, [#allocation7], [#allocation8]
    $region9: #{tpu_custom_call.1} parent=1 // pred_fallthru
      _
    // Predicated region
    $region10: #{tpu_custom_call.1} parent=1 // pred_check
      _
    $region11: #{tpu_custom_call.1} parent=1 // pred_check_branch
      %37 = sbr.rel (0) target = $region13
    $region12: #{tpu_custom_call.1} parent=1 // pred_region
      %39 = vsyncadd [#allocation6], 0
      %s41 = sshll.u32 %s2, 4
      %s42 = int_to_ptr.vmem [resolvable:$true] %s41
      %44 = dma.vmem_to_smem %s42, 16, [#allocation9], [#allocation6]
    $region13: #{tpu_custom_call.1} parent=1 // pred_fallthru
      _
    // Predicated region
    $region14: #{tpu_custom_call.1} parent=1 // pred_check
      _
    $region15: #{tpu_custom_call.1} parent=1 // pred_check_branch
      %46 = sbr.rel (0) target = $region17
    $region16: #{tpu_custom_call.1} parent=1 // pred_region
      %48 = vsyncadd [#allocation11], 0
      %s50 = sshll.u32 %s3, 4
      %s51 = int_to_ptr.vmem [resolvable:$true] %s50
      %53 = dma.vmem_to_smem %s51, 16, [#allocation10], [#allocation11]
    $region17: #{tpu_custom_call.1} parent=1 // pred_fallthru
      _
    // Predicated region
    $region18: #{tpu_custom_call.1} parent=1 // pred_check
      _
    $region19: #{tpu_custom_call.1} parent=1 // pred_check_branch
      %55 = sbr.rel (0) target = $region21
    $region20: #{tpu_custom_call.1} parent=1 // pred_region
      %57 = vsyncadd [#allocation3], 0
      %s59 = sshll.u32 %s4, 4
      %s60 = int_to_ptr.hbm [resolvable:$true] %s59
      %s61 = sshll.u32 [#allocation12], 4
      %s62 = int_to_ptr.vmem [resolvable:$true] %s61
      %64 = dma.hbm_to_vmem [thread:$0]  %s60, 128, %s62, [#allocation3]
    $region21: #{tpu_custom_call.1} parent=1 // pred_fallthru
      _
    // Predicated region
    $region22: #{tpu_custom_call.1} parent=1 // pred_check
      _
    $region23: #{tpu_custom_call.1} parent=1 // pred_check_branch
      %66 = sbr.rel (0) target = $region25
    $region24: #{tpu_custom_call.1} parent=1 // pred_region
      %68 = vsyncadd [#allocation14], 0
      %s70 = sshll.u32 %s5, 4
      %s71 = int_to_ptr.hbm [resolvable:$true] %s70
      %s72 = sshll.u32 [#allocation13], 4
      %s73 = int_to_ptr.vmem [resolvable:$true] %s72
      %75 = dma.hbm_to_vmem [thread:$0]  %s71, 128, %s73, [#allocation14]
    $region25: #{tpu_custom_call.1} parent=1 // pred_fallthru
      _
    // Predicated region
    $region26: #{tpu_custom_call.1} parent=1 // pred_check
      _
    $region27: #{tpu_custom_call.1} parent=1 // pred_check_branch
      %77 = sbr.rel (0) target = $region29
    $region28: #{tpu_custom_call.1} parent=1 // pred_region
      %79 = dma.done [#allocation5], 16
    $region29: #{tpu_custom_call.1} parent=1 // pred_fallthru
      _
    // Predicated region
    $region30: #{tpu_custom_call.1} parent=1 // pred_check
      _
    $region31: #{tpu_custom_call.1} parent=1 // pred_check_branch
      %81 = sbr.rel (0) target = $region33
    $region32: #{tpu_custom_call.1} parent=1 // pred_region
      %83 = dma.done [#allocation8], 16
    $region33: #{tpu_custom_call.1} parent=1 // pred_fallthru
      _
    // Predicated region
    $region34: #{tpu_custom_call.1} parent=1 // pred_check
      _
    $region35: #{tpu_custom_call.1} parent=1 // pred_check_branch
      %85 = sbr.rel (0) target = $region37
    $region36: #{tpu_custom_call.1} parent=1 // pred_region
      %87 = dma.done [#allocation6], 16
    $region37: #{tpu_custom_call.1} parent=1 // pred_fallthru
      _
    // Predicated region
    $region38: #{tpu_custom_call.1} parent=1 // pred_check
      _
    $region39: #{tpu_custom_call.1} parent=1 // pred_check_branch
      %89 = sbr.rel (0) target = $region41
    $region40: #{tpu_custom_call.1} parent=1 // pred_region
      %91 = dma.done [#allocation11], 16
    $region41: #{tpu_custom_call.1} parent=1 // pred_fallthru
      _
    // Predicated region
    $region42: #{tpu_custom_call.1} parent=1 // pred_check
      _
    $region43: #{tpu_custom_call.1} parent=1 // pred_check_branch
      %93 = sbr.rel (0) target = $region45
    $region44: #{tpu_custom_call.1} parent=1 // pred_region
      %95 = dma.done [#allocation3], 128
    $region45: #{tpu_custom_call.1} parent=1 // pred_fallthru
      _
    // Predicated region
    $region46: #{tpu_custom_call.1} parent=1 // pred_check
      _
    $region47: #{tpu_custom_call.1} parent=1 // pred_check_branch
      %97 = sbr.rel (0) target = $region49
    $region48: #{tpu_custom_call.1} parent=1 // pred_region
      %99 = dma.done [#allocation14], 128
    $region49: #{tpu_custom_call.1} parent=1 // pred_fallthru
      _
    %100 = sfence
    %v101 = vld [vmem:[#allocation12] sm:$0xff]
    %v102 = vld [vmem:[#allocation13] sm:$0xff]
    %s103 = sld [smem:[#allocation10]]
    %v104 = vstv %s103
    %v105 = vsub.f32 %v102, %v104
    %s106 = sld [smem:[#allocation10 + $0x1]]
    %v107 = vstv %s106
    %v108 = vsub.f32 %v102, %v107
    %s109 = sld [smem:[#allocation10 + $0x2]]
    %v110 = vstv %s109
    %v111 = vsub.f32 %v102, %v110
    %s112 = sld [smem:[#allocation2]]
    %v113 = vstv %s112
    %v114 = vmul.f32 %v113, %v101
    %s115 = sld [smem:[#allocation7]]
    %v116 = vstv %s115
    %v117 = vadd.f32 %v114, %v116
    %v118 = vmax.f32 %v117, 0.0
    %s119 = sld [smem:[#allocation9]]
    %v120 = vstv %s119
    %v121 = vmul.f32 %v120, %v118
    %s122 = sld [smem:[#allocation9 + $0x1]]
    %v123 = vstv %s122
    %v124 = vmul.f32 %v123, %v118
    %s125 = sld [smem:[#allocation9 + $0x2]]
    %v126 = vstv %s125
    %v127 = vmul.f32 %v126, %v118
    %s128 = sld [smem:[#allocation2 + $0x1]]
    %v129 = vstv %s128
    %v130 = vmul.f32 %v129, %v101
    %s131 = sld [smem:[#allocation7 + $0x1]]
    %v132 = vstv %s131
    %v133 = vadd.f32 %v130, %v132
    %v134 = vmax.f32 %v133, 0.0
    %s135 = sld [smem:[#allocation9 + $0x3]]
    %v136 = vstv %s135
    %v137 = vmul.f32 %v136, %v134
    %v138 = vadd.f32 %v121, %v137
    %s139 = sld [smem:[#allocation9 + $0x4]]
    %v140 = vstv %s139
    %v141 = vmul.f32 %v140, %v134
    %v142 = vadd.f32 %v124, %v141
    %s143 = sld [smem:[#allocation9 + $0x5]]
    %v144 = vstv %s143
    %v145 = vmul.f32 %v144, %v134
    %v146 = vadd.f32 %v127, %v145
    %s147 = sld [smem:[#allocation2 + $0x2]]
    %v148 = vstv %s147
    %v149 = vmul.f32 %v148, %v101
    %s150 = sld [smem:[#allocation7 + $0x2]]
    %v151 = vstv %s150
    %v152 = vadd.f32 %v149, %v151
    %v153 = vmax.f32 %v152, 0.0
    %s154 = sld [smem:[#allocation9 + $0x6]]
    %v155 = vstv %s154
    %v156 = vmul.f32 %v155, %v153
    %v157 = vadd.f32 %v138, %v156
    %s158 = sld [smem:[#allocation9 + $0x7]]
    %v159 = vstv %s158
    %v160 = vmul.f32 %v159, %v153
    %v161 = vadd.f32 %v142, %v160
    %s162 = sld [smem:[#allocation9 + $0x8]]
    %v163 = vstv %s162
    %v164 = vmul.f32 %v163, %v153
    %v165 = vadd.f32 %v146, %v164
    %s166 = sld [smem:[#allocation2 + $0x3]]
    %v167 = vstv %s166
    %v168 = vmul.f32 %v167, %v101
    %s169 = sld [smem:[#allocation7 + $0x3]]
    %v170 = vstv %s169
    %v171 = vadd.f32 %v168, %v170
    %v172 = vmax.f32 %v171, 0.0
    %s173 = sld [smem:[#allocation9 + $0x9]]
    %v174 = vstv %s173
    %v175 = vmul.f32 %v174, %v172
    %v176 = vadd.f32 %v157, %v175
    %s177 = sld [smem:[#allocation9 + $0xa]]
    %v178 = vstv %s177
    %v179 = vmul.f32 %v178, %v172
    %v180 = vadd.f32 %v161, %v179
    %s181 = sld [smem:[#allocation9 + $0xb]]
    %v182 = vstv %s181
    %v183 = vmul.f32 %v182, %v172
    %v184 = vadd.f32 %v165, %v183
    %s185 = sld [smem:[#allocation2 + $0x4]]
    %v186 = vstv %s185
    %v187 = vmul.f32 %v186, %v101
    %s188 = sld [smem:[#allocation7 + $0x4]]
    %v189 = vstv %s188
    %v190 = vadd.f32 %v187, %v189
    %v191 = vmax.f32 %v190, 0.0
    %s192 = sld [smem:[#allocation9 + $0xc]]
    %v193 = vstv %s192
    %v194 = vmul.f32 %v193, %v191
    %v195 = vadd.f32 %v176, %v194
    %s196 = sld [smem:[#allocation9 + $0xd]]
    %v197 = vstv %s196
    %v198 = vmul.f32 %v197, %v191
    %v199 = vadd.f32 %v180, %v198
    %s200 = sld [smem:[#allocation9 + $0xe]]
    %v201 = vstv %s200
    %v202 = vmul.f32 %v201, %v191
    %v203 = vadd.f32 %v184, %v202
    %s204 = sld [smem:[#allocation2 + $0x5]]
    %v205 = vstv %s204
    %v206 = vmul.f32 %v205, %v101
    %s207 = sld [smem:[#allocation7 + $0x5]]
    %v208 = vstv %s207
    %v209 = vadd.f32 %v206, %v208
    %v210 = vmax.f32 %v209, 0.0
    %s211 = sld [smem:[#allocation9 + $0xf]]
    %v212 = vstv %s211
    %v213 = vmul.f32 %v212, %v210
    %v214 = vadd.f32 %v195, %v213
    %s215 = sld [smem:[#allocation9 + $0x10]]
    %v216 = vstv %s215
    %v217 = vmul.f32 %v216, %v210
    %v218 = vadd.f32 %v199, %v217
    %s219 = sld [smem:[#allocation9 + $0x11]]
    %v220 = vstv %s219
    %v221 = vmul.f32 %v220, %v210
    %v222 = vadd.f32 %v203, %v221
    %s223 = sld [smem:[#allocation2 + $0x6]]
    %v224 = vstv %s223
    %v225 = vmul.f32 %v224, %v101
    %s226 = sld [smem:[#allocation7 + $0x6]]
    %v227 = vstv %s226
    %v228 = vadd.f32 %v225, %v227
    %v229 = vmax.f32 %v228, 0.0
    %s230 = sld [smem:[#allocation9 + $0x12]]
    %v231 = vstv %s230
    %v232 = vmul.f32 %v231, %v229
    %v233 = vadd.f32 %v214, %v232
    %s234 = sld [smem:[#allocation9 + $0x13]]
    %v235 = vstv %s234
    %v236 = vmul.f32 %v235, %v229
    %v237 = vadd.f32 %v218, %v236
    %s238 = sld [smem:[#allocation9 + $0x14]]
    %v239 = vstv %s238
    %v240 = vmul.f32 %v239, %v229
    %v241 = vadd.f32 %v222, %v240
    %s242 = sld [smem:[#allocation2 + $0x7]]
    %v243 = vstv %s242
    %v244 = vmul.f32 %v243, %v101
    %s245 = sld [smem:[#allocation7 + $0x7]]
    %v246 = vstv %s245
    %v247 = vadd.f32 %v244, %v246
    %v248 = vmax.f32 %v247, 0.0
    %s249 = sld [smem:[#allocation9 + $0x15]]
    %v250 = vstv %s249
    %v251 = vmul.f32 %v250, %v248
    %v252 = vadd.f32 %v233, %v251
    %s253 = sld [smem:[#allocation9 + $0x16]]
    %v254 = vstv %s253
    %v255 = vmul.f32 %v254, %v248
    %v256 = vadd.f32 %v237, %v255
    %s257 = sld [smem:[#allocation9 + $0x17]]
    %v258 = vstv %s257
    %v259 = vmul.f32 %v258, %v248
    %v260 = vadd.f32 %v241, %v259
    %s261 = sld [smem:[#allocation2 + $0x8]]
    %v262 = vstv %s261
    %v263 = vmul.f32 %v262, %v101
    %s264 = sld [smem:[#allocation7 + $0x8]]
    %v265 = vstv %s264
    %v266 = vadd.f32 %v263, %v265
    %v267 = vmax.f32 %v266, 0.0
    %s268 = sld [smem:[#allocation9 + $0x18]]
    %v269 = vstv %s268
    %v270 = vmul.f32 %v269, %v267
    %v271 = vadd.f32 %v252, %v270
    %s272 = sld [smem:[#allocation9 + $0x19]]
    %v273 = vstv %s272
    %v274 = vmul.f32 %v273, %v267
    %v275 = vadd.f32 %v256, %v274
    %s276 = sld [smem:[#allocation9 + $0x1a]]
    %v277 = vstv %s276
    %v278 = vmul.f32 %v277, %v267
    %v279 = vadd.f32 %v260, %v278
    %s280 = sld [smem:[#allocation2 + $0x9]]
    %v281 = vstv %s280
    %v282 = vmul.f32 %v281, %v101
    %s283 = sld [smem:[#allocation7 + $0x9]]
    %v284 = vstv %s283
    %v285 = vadd.f32 %v282, %v284
    %v286 = vmax.f32 %v285, 0.0
    %s287 = sld [smem:[#allocation9 + $0x1b]]
    %v288 = vstv %s287
    %v289 = vmul.f32 %v288, %v286
    %v290 = vadd.f32 %v271, %v289
    %s291 = sld [smem:[#allocation9 + $0x1c]]
    %v292 = vstv %s291
    %v293 = vmul.f32 %v292, %v286
    %v294 = vadd.f32 %v275, %v293
    %s295 = sld [smem:[#allocation9 + $0x1d]]
    %v296 = vstv %s295
    %v297 = vmul.f32 %v296, %v286
    %v298 = vadd.f32 %v279, %v297
    %s299 = sld [smem:[#allocation2 + $0xa]]
    %v300 = vstv %s299
    %v301 = vmul.f32 %v300, %v101
    %s302 = sld [smem:[#allocation7 + $0xa]]
    %v303 = vstv %s302
    %v304 = vadd.f32 %v301, %v303
    %v305 = vmax.f32 %v304, 0.0
    %s306 = sld [smem:[#allocation9 + $0x1e]]
    %v307 = vstv %s306
    %v308 = vmul.f32 %v307, %v305
    %v309 = vadd.f32 %v290, %v308
    %s310 = sld [smem:[#allocation9 + $0x1f]]
    %v311 = vstv %s310
    %v312 = vmul.f32 %v311, %v305
    %v313 = vadd.f32 %v294, %v312
    %s314 = sld [smem:[#allocation9 + $0x20]]
    %v315 = vstv %s314
    %v316 = vmul.f32 %v315, %v305
    %v317 = vadd.f32 %v298, %v316
    %s318 = sld [smem:[#allocation2 + $0xb]]
    %v319 = vstv %s318
    %v320 = vmul.f32 %v319, %v101
    %s321 = sld [smem:[#allocation7 + $0xb]]
    %v322 = vstv %s321
    %v323 = vadd.f32 %v320, %v322
    %v324 = vmax.f32 %v323, 0.0
    %s325 = sld [smem:[#allocation9 + $0x21]]
    %v326 = vstv %s325
    %v327 = vmul.f32 %v326, %v324
    %v328 = vadd.f32 %v309, %v327
    %s329 = sld [smem:[#allocation9 + $0x22]]
    %v330 = vstv %s329
    %v331 = vmul.f32 %v330, %v324
    %v332 = vadd.f32 %v313, %v331
    %s333 = sld [smem:[#allocation9 + $0x23]]
    %v334 = vstv %s333
    %v335 = vmul.f32 %v334, %v324
    %v336 = vadd.f32 %v317, %v335
    %s337 = sld [smem:[#allocation2 + $0xc]]
    %v338 = vstv %s337
    %v339 = vmul.f32 %v338, %v101
    %s340 = sld [smem:[#allocation7 + $0xc]]
    %v341 = vstv %s340
    %v342 = vadd.f32 %v339, %v341
    %v343 = vmax.f32 %v342, 0.0
    %s344 = sld [smem:[#allocation9 + $0x24]]
    %v345 = vstv %s344
    %v346 = vmul.f32 %v345, %v343
    %v347 = vadd.f32 %v328, %v346
    %s348 = sld [smem:[#allocation9 + $0x25]]
    %v349 = vstv %s348
    %v350 = vmul.f32 %v349, %v343
    %v351 = vadd.f32 %v332, %v350
    %s352 = sld [smem:[#allocation9 + $0x26]]
    %v353 = vstv %s352
    %v354 = vmul.f32 %v353, %v343
    %v355 = vadd.f32 %v336, %v354
    %s356 = sld [smem:[#allocation2 + $0xd]]
    %v357 = vstv %s356
    %v358 = vmul.f32 %v357, %v101
    %s359 = sld [smem:[#allocation7 + $0xd]]
    %v360 = vstv %s359
    %v361 = vadd.f32 %v358, %v360
    %v362 = vmax.f32 %v361, 0.0
    %s363 = sld [smem:[#allocation9 + $0x27]]
    %v364 = vstv %s363
    %v365 = vmul.f32 %v364, %v362
    %v366 = vadd.f32 %v347, %v365
    %s367 = sld [smem:[#allocation9 + $0x28]]
    %v368 = vstv %s367
    %v369 = vmul.f32 %v368, %v362
    %v370 = vadd.f32 %v351, %v369
    %s371 = sld [smem:[#allocation9 + $0x29]]
    %v372 = vstv %s371
    %v373 = vmul.f32 %v372, %v362
    %v374 = vadd.f32 %v355, %v373
    %s375 = sld [smem:[#allocation2 + $0xe]]
    %v376 = vstv %s375
    %v377 = vmul.f32 %v376, %v101
    %s378 = sld [smem:[#allocation7 + $0xe]]
    %v379 = vstv %s378
    %v380 = vadd.f32 %v377, %v379
    %v381 = vmax.f32 %v380, 0.0
    %s382 = sld [smem:[#allocation9 + $0x2a]]
    %v383 = vstv %s382
    %v384 = vmul.f32 %v383, %v381
    %v385 = vadd.f32 %v366, %v384
    %s386 = sld [smem:[#allocation9 + $0x2b]]
    %v387 = vstv %s386
    %v388 = vmul.f32 %v387, %v381
    %v389 = vadd.f32 %v370, %v388
    %s390 = sld [smem:[#allocation9 + $0x2c]]
    %v391 = vstv %s390
    %v392 = vmul.f32 %v391, %v381
    %v393 = vadd.f32 %v374, %v392
    %s394 = sld [smem:[#allocation2 + $0xf]]
    %v395 = vstv %s394
    %v396 = vmul.f32 %v395, %v101
    %s397 = sld [smem:[#allocation7 + $0xf]]
    %v398 = vstv %s397
    %v399 = vadd.f32 %v396, %v398
    %v400 = vmax.f32 %v399, 0.0
    %s401 = sld [smem:[#allocation9 + $0x2d]]
    %v402 = vstv %s401
    %v403 = vmul.f32 %v402, %v400
    %v404 = vadd.f32 %v385, %v403
    %s405 = sld [smem:[#allocation9 + $0x2e]]
    %v406 = vstv %s405
    %v407 = vmul.f32 %v406, %v400
    %v408 = vadd.f32 %v389, %v407
    %s409 = sld [smem:[#allocation9 + $0x2f]]
    %v410 = vstv %s409
    %v411 = vmul.f32 %v410, %v400
    %v412 = vadd.f32 %v393, %v411
    %s413 = sld [smem:[#allocation2 + $0x10]]
    %v414 = vstv %s413
    %v415 = vmul.f32 %v414, %v101
    %s416 = sld [smem:[#allocation7 + $0x10]]
    %v417 = vstv %s416
    %v418 = vadd.f32 %v415, %v417
    %v419 = vmax.f32 %v418, 0.0
    %s420 = sld [smem:[#allocation9 + $0x30]]
    %v421 = vstv %s420
    %v422 = vmul.f32 %v421, %v419
    %v423 = vadd.f32 %v404, %v422
    %s424 = sld [smem:[#allocation9 + $0x31]]
    %v425 = vstv %s424
    %v426 = vmul.f32 %v425, %v419
    %v427 = vadd.f32 %v408, %v426
    %s428 = sld [smem:[#allocation9 + $0x32]]
    %v429 = vstv %s428
    %v430 = vmul.f32 %v429, %v419
    %v431 = vadd.f32 %v412, %v430
    %s432 = sld [smem:[#allocation2 + $0x11]]
    %v433 = vstv %s432
    %v434 = vmul.f32 %v433, %v101
    %s435 = sld [smem:[#allocation7 + $0x11]]
    %v436 = vstv %s435
    %v437 = vadd.f32 %v434, %v436
    %v438 = vmax.f32 %v437, 0.0
    %s439 = sld [smem:[#allocation9 + $0x33]]
    %v440 = vstv %s439
    %v441 = vmul.f32 %v440, %v438
    %v442 = vadd.f32 %v423, %v441
    %s443 = sld [smem:[#allocation9 + $0x34]]
    %v444 = vstv %s443
    %v445 = vmul.f32 %v444, %v438
    %v446 = vadd.f32 %v427, %v445
    %s447 = sld [smem:[#allocation9 + $0x35]]
    %v448 = vstv %s447
    %v449 = vmul.f32 %v448, %v438
    %v450 = vadd.f32 %v431, %v449
    %s451 = sld [smem:[#allocation2 + $0x12]]
    %v452 = vstv %s451
    %v453 = vmul.f32 %v452, %v101
    %s454 = sld [smem:[#allocation7 + $0x12]]
    %v455 = vstv %s454
    %v456 = vadd.f32 %v453, %v455
    %v457 = vmax.f32 %v456, 0.0
    %s458 = sld [smem:[#allocation9 + $0x36]]
    %v459 = vstv %s458
    %v460 = vmul.f32 %v459, %v457
    %v461 = vadd.f32 %v442, %v460
    %s462 = sld [smem:[#allocation9 + $0x37]]
    %v463 = vstv %s462
    %v464 = vmul.f32 %v463, %v457
    %v465 = vadd.f32 %v446, %v464
    %s466 = sld [smem:[#allocation9 + $0x38]]
    %v467 = vstv %s466
    %v468 = vmul.f32 %v467, %v457
    %v469 = vadd.f32 %v450, %v468
    %s470 = sld [smem:[#allocation2 + $0x13]]
    %v471 = vstv %s470
    %v472 = vmul.f32 %v471, %v101
    %s473 = sld [smem:[#allocation7 + $0x13]]
    %v474 = vstv %s473
    %v475 = vadd.f32 %v472, %v474
    %v476 = vmax.f32 %v475, 0.0
    %s477 = sld [smem:[#allocation9 + $0x39]]
    %v478 = vstv %s477
    %v479 = vmul.f32 %v478, %v476
    %v480 = vadd.f32 %v461, %v479
    %s481 = sld [smem:[#allocation9 + $0x3a]]
    %v482 = vstv %s481
    %v483 = vmul.f32 %v482, %v476
    %v484 = vadd.f32 %v465, %v483
    %s485 = sld [smem:[#allocation9 + $0x3b]]
    %v486 = vstv %s485
    %v487 = vmul.f32 %v486, %v476
    %v488 = vadd.f32 %v469, %v487
    %s489 = sld [smem:[#allocation2 + $0x14]]
    %v490 = vstv %s489
    %v491 = vmul.f32 %v490, %v101
    %s492 = sld [smem:[#allocation7 + $0x14]]
    %v493 = vstv %s492
    %v494 = vadd.f32 %v491, %v493
    %v495 = vmax.f32 %v494, 0.0
    %s496 = sld [smem:[#allocation9 + $0x3c]]
    %v497 = vstv %s496
    %v498 = vmul.f32 %v497, %v495
    %v499 = vadd.f32 %v480, %v498
    %s500 = sld [smem:[#allocation9 + $0x3d]]
    %v501 = vstv %s500
    %v502 = vmul.f32 %v501, %v495
    %v503 = vadd.f32 %v484, %v502
    %s504 = sld [smem:[#allocation9 + $0x3e]]
    %v505 = vstv %s504
    %v506 = vmul.f32 %v505, %v495
    %v507 = vadd.f32 %v488, %v506
    %s508 = sld [smem:[#allocation2 + $0x15]]
    %v509 = vstv %s508
    %v510 = vmul.f32 %v509, %v101
    %s511 = sld [smem:[#allocation7 + $0x15]]
    %v512 = vstv %s511
    %v513 = vadd.f32 %v510, %v512
    %v514 = vmax.f32 %v513, 0.0
    %s515 = sld [smem:[#allocation9 + $0x3f]]
    %v516 = vstv %s515
    %v517 = vmul.f32 %v516, %v514
    %v518 = vadd.f32 %v499, %v517
    %s519 = sld [smem:[#allocation9 + $0x40]]
    %v520 = vstv %s519
    %v521 = vmul.f32 %v520, %v514
    %v522 = vadd.f32 %v503, %v521
    %s523 = sld [smem:[#allocation9 + $0x41]]
    %v524 = vstv %s523
    %v525 = vmul.f32 %v524, %v514
    %v526 = vadd.f32 %v507, %v525
    %s527 = sld [smem:[#allocation2 + $0x16]]
    %v528 = vstv %s527
    %v529 = vmul.f32 %v528, %v101
    %s530 = sld [smem:[#allocation7 + $0x16]]
    %v531 = vstv %s530
    %v532 = vadd.f32 %v529, %v531
    %v533 = vmax.f32 %v532, 0.0
    %s534 = sld [smem:[#allocation9 + $0x42]]
    %v535 = vstv %s534
    %v536 = vmul.f32 %v535, %v533
    %v537 = vadd.f32 %v518, %v536
    %s538 = sld [smem:[#allocation9 + $0x43]]
    %v539 = vstv %s538
    %v540 = vmul.f32 %v539, %v533
    %v541 = vadd.f32 %v522, %v540
    %s542 = sld [smem:[#allocation9 + $0x44]]
    %v543 = vstv %s542
    %v544 = vmul.f32 %v543, %v533
    %v545 = vadd.f32 %v526, %v544
    %s546 = sld [smem:[#allocation2 + $0x17]]
    %v547 = vstv %s546
    %v548 = vmul.f32 %v547, %v101
    %s549 = sld [smem:[#allocation7 + $0x17]]
    %v550 = vstv %s549
    %v551 = vadd.f32 %v548, %v550
    %v552 = vmax.f32 %v551, 0.0
    %s553 = sld [smem:[#allocation9 + $0x45]]
    %v554 = vstv %s553
    %v555 = vmul.f32 %v554, %v552
    %v556 = vadd.f32 %v537, %v555
    %s557 = sld [smem:[#allocation9 + $0x46]]
    %v558 = vstv %s557
    %v559 = vmul.f32 %v558, %v552
    %v560 = vadd.f32 %v541, %v559
    %s561 = sld [smem:[#allocation9 + $0x47]]
    %v562 = vstv %s561
    %v563 = vmul.f32 %v562, %v552
    %v564 = vadd.f32 %v545, %v563
    %s565 = sld [smem:[#allocation2 + $0x18]]
    %v566 = vstv %s565
    %v567 = vmul.f32 %v566, %v101
    %s568 = sld [smem:[#allocation7 + $0x18]]
    %v569 = vstv %s568
    %v570 = vadd.f32 %v567, %v569
    %v571 = vmax.f32 %v570, 0.0
    %s572 = sld [smem:[#allocation9 + $0x48]]
    %v573 = vstv %s572
    %v574 = vmul.f32 %v573, %v571
    %v575 = vadd.f32 %v556, %v574
    %s576 = sld [smem:[#allocation9 + $0x49]]
    %v577 = vstv %s576
    %v578 = vmul.f32 %v577, %v571
    %v579 = vadd.f32 %v560, %v578
    %s580 = sld [smem:[#allocation9 + $0x4a]]
    %v581 = vstv %s580
    %v582 = vmul.f32 %v581, %v571
    %v583 = vadd.f32 %v564, %v582
    %s584 = sld [smem:[#allocation2 + $0x19]]
    %v585 = vstv %s584
    %v586 = vmul.f32 %v585, %v101
    %s587 = sld [smem:[#allocation7 + $0x19]]
    %v588 = vstv %s587
    %v589 = vadd.f32 %v586, %v588
    %v590 = vmax.f32 %v589, 0.0
    %s591 = sld [smem:[#allocation9 + $0x4b]]
    %v592 = vstv %s591
    %v593 = vmul.f32 %v592, %v590
    %v594 = vadd.f32 %v575, %v593
    %s595 = sld [smem:[#allocation9 + $0x4c]]
    %v596 = vstv %s595
    %v597 = vmul.f32 %v596, %v590
    %v598 = vadd.f32 %v579, %v597
    %s599 = sld [smem:[#allocation9 + $0x4d]]
    %v600 = vstv %s599
    %v601 = vmul.f32 %v600, %v590
    %v602 = vadd.f32 %v583, %v601
    %s603 = sld [smem:[#allocation2 + $0x1a]]
    %v604 = vstv %s603
    %v605 = vmul.f32 %v604, %v101
    %s606 = sld [smem:[#allocation7 + $0x1a]]
    %v607 = vstv %s606
    %v608 = vadd.f32 %v605, %v607
    %v609 = vmax.f32 %v608, 0.0
    %s610 = sld [smem:[#allocation9 + $0x4e]]
    %v611 = vstv %s610
    %v612 = vmul.f32 %v611, %v609
    %v613 = vadd.f32 %v594, %v612
    %s614 = sld [smem:[#allocation9 + $0x4f]]
    %v615 = vstv %s614
    %v616 = vmul.f32 %v615, %v609
    %v617 = vadd.f32 %v598, %v616
    %s618 = sld [smem:[#allocation9 + $0x50]]
    %v619 = vstv %s618
    %v620 = vmul.f32 %v619, %v609
    %v621 = vadd.f32 %v602, %v620
    %s622 = sld [smem:[#allocation2 + $0x1b]]
    %v623 = vstv %s622
    %v624 = vmul.f32 %v623, %v101
    %s625 = sld [smem:[#allocation7 + $0x1b]]
    %v626 = vstv %s625
    %v627 = vadd.f32 %v624, %v626
    %v628 = vmax.f32 %v627, 0.0
    %s629 = sld [smem:[#allocation9 + $0x51]]
    %v630 = vstv %s629
    %v631 = vmul.f32 %v630, %v628
    %v632 = vadd.f32 %v613, %v631
    %s633 = sld [smem:[#allocation9 + $0x52]]
    %v634 = vstv %s633
    %v635 = vmul.f32 %v634, %v628
    %v636 = vadd.f32 %v617, %v635
    %s637 = sld [smem:[#allocation9 + $0x53]]
    %v638 = vstv %s637
    %v639 = vmul.f32 %v638, %v628
    %v640 = vadd.f32 %v621, %v639
    %s641 = sld [smem:[#allocation2 + $0x1c]]
    %v642 = vstv %s641
    %v643 = vmul.f32 %v642, %v101
    %s644 = sld [smem:[#allocation7 + $0x1c]]
    %v645 = vstv %s644
    %v646 = vadd.f32 %v643, %v645
    %v647 = vmax.f32 %v646, 0.0
    %s648 = sld [smem:[#allocation9 + $0x54]]
    %v649 = vstv %s648
    %v650 = vmul.f32 %v649, %v647
    %v651 = vadd.f32 %v632, %v650
    %s652 = sld [smem:[#allocation9 + $0x55]]
    %v653 = vstv %s652
    %v654 = vmul.f32 %v653, %v647
    %v655 = vadd.f32 %v636, %v654
    %s656 = sld [smem:[#allocation9 + $0x56]]
    %v657 = vstv %s656
    %v658 = vmul.f32 %v657, %v647
    %v659 = vadd.f32 %v640, %v658
    %s660 = sld [smem:[#allocation2 + $0x1d]]
    %v661 = vstv %s660
    %v662 = vmul.f32 %v661, %v101
    %s663 = sld [smem:[#allocation7 + $0x1d]]
    %v664 = vstv %s663
    %v665 = vadd.f32 %v662, %v664
    %v666 = vmax.f32 %v665, 0.0
    %s667 = sld [smem:[#allocation9 + $0x57]]
    %v668 = vstv %s667
    %v669 = vmul.f32 %v668, %v666
    %v670 = vadd.f32 %v651, %v669
    %s671 = sld [smem:[#allocation9 + $0x58]]
    %v672 = vstv %s671
    %v673 = vmul.f32 %v672, %v666
    %v674 = vadd.f32 %v655, %v673
    %s675 = sld [smem:[#allocation9 + $0x59]]
    %v676 = vstv %s675
    %v677 = vmul.f32 %v676, %v666
    %v678 = vadd.f32 %v659, %v677
    %s679 = sld [smem:[#allocation2 + $0x1e]]
    %v680 = vstv %s679
    %v681 = vmul.f32 %v680, %v101
    %s682 = sld [smem:[#allocation7 + $0x1e]]
    %v683 = vstv %s682
    %v684 = vadd.f32 %v681, %v683
    %v685 = vmax.f32 %v684, 0.0
    %s686 = sld [smem:[#allocation9 + $0x5a]]
    %v687 = vstv %s686
    %v688 = vmul.f32 %v687, %v685
    %v689 = vadd.f32 %v670, %v688
    %s690 = sld [smem:[#allocation9 + $0x5b]]
    %v691 = vstv %s690
    %v692 = vmul.f32 %v691, %v685
    %v693 = vadd.f32 %v674, %v692
    %s694 = sld [smem:[#allocation9 + $0x5c]]
    %v695 = vstv %s694
    %v696 = vmul.f32 %v695, %v685
    %v697 = vadd.f32 %v678, %v696
    %s698 = sld [smem:[#allocation2 + $0x1f]]
    %v699 = vstv %s698
    %v700 = vmul.f32 %v699, %v101
    %s701 = sld [smem:[#allocation7 + $0x1f]]
    %v702 = vstv %s701
    %v703 = vadd.f32 %v700, %v702
    %v704 = vmax.f32 %v703, 0.0
    %s705 = sld [smem:[#allocation9 + $0x5d]]
    %v706 = vstv %s705
    %v707 = vmul.f32 %v706, %v704
    %v708 = vadd.f32 %v689, %v707
    %s709 = sld [smem:[#allocation9 + $0x5e]]
    %v710 = vstv %s709
    %v711 = vmul.f32 %v710, %v704
    %v712 = vadd.f32 %v693, %v711
    %s713 = sld [smem:[#allocation9 + $0x5f]]
    %v714 = vstv %s713
    %v715 = vmul.f32 %v714, %v704
    %v716 = vadd.f32 %v697, %v715
    %vm717 = vcmp.lt.f32.partialorder %v708, %v105
    %v718 = vsel %vm717, 1, 0
    %vm719 = vcmp.lt.f32.partialorder %v712, %v108
    %v720 = vsel %vm719, 1, 0
    %v721 = vadd.s32 %v718, %v720
    %vm722 = vcmp.lt.f32.partialorder %v716, %v111
    %v723 = vsel %vm722, 1, 0
    %v724 = vadd.s32 %v721, %v723
    %725 = vst [vmem:[#allocation15] sm:$0xff] %v724
    // Predicated region
    $region50: #{tpu_custom_call.1} parent=1 // pred_check
      _
    $region51: #{tpu_custom_call.1} parent=1 // pred_check_branch
      %727 = sbr.rel (0) target = $region53
    $region52: #{tpu_custom_call.1} parent=1 // pred_region
      %729 = vsyncadd [#allocation4], 0
      %s731 = sshll.u32 [#allocation15], 4
      %s732 = int_to_ptr.vmem [resolvable:$true] %s731
      %s733 = sshll.u32 %s6, 4
      %s734 = int_to_ptr.hbm [resolvable:$true] %s733
      %736 = dma.vmem_to_hbm [thread:$0]  %s732, 128, %s734, [#allocation4]
    $region53: #{tpu_custom_call.1} parent=1 // pred_fallthru
      _
    // Predicated region
    $region54: #{tpu_custom_call.1} parent=1 // pred_check
      _
    $region55: #{tpu_custom_call.1} parent=1 // pred_check_branch
      %738 = sbr.rel (0) target = $region57
    $region56: #{tpu_custom_call.1} parent=1 // pred_region
      %740 = dma.done [#allocation4], 128
    $region57: #{tpu_custom_call.1} parent=1 // pred_fallthru
      _
    %741 = vsyncpa [#allocation3], 1
    %742 = vsyncpa [#allocation14], 1
    %743 = vsyncpa [#allocation4], 1
    %744 = vsyncpa [#allocation5], 1
    %745 = vsyncpa [#allocation8], 1
    %746 = vsyncpa [#allocation6], 1
    %747 = vsyncpa [#allocation11], 1

</llo_original>
